<compile_context>
chip_gen: v5e
topology: v5e:2x2
jax: 0.10.0
libtpu: 0.0.40
codegen_flags: <defaults>
</compile_context>

<pallas_src>
import functools

import jax
import jax.numpy as jnp
import numpy as np
from jax.experimental import pallas as pl
from jax.experimental.pallas import tpu as pltpu

# Logical layer sizes (from the PyTorch module) and their lane-padded versions.
IN_DIM = 3072          # 3 * 32 * 32, already a multiple of 128
H1, H2, OUT = 200, 200, 10
H1P, H2P, OUTP = 256, 256, 128


def _round_up(x, m):
    return ((x + m - 1) // m) * m


# ----------------------------------------------------------------------------
# Pallas kernel: fused 3-layer MLP over one row tile
# ----------------------------------------------------------------------------
def _mlp3_kernel(x_ref, w1_ref, b1_ref, w2_ref, b2_ref, w3_ref, b3_ref, o_ref):
    # x_ref: (T, 3072) f32, w*: bf16, b*: f32 (1, C), o_ref: (T, 128) f32.
    x = x_ref[...].astype(jnp.bfloat16)          # in-kernel cast (VPU, hidden)
    h = jnp.dot(x, w1_ref[...], preferred_element_type=jnp.float32)
    h = jnp.maximum(h + b1_ref[...], 0.0)        # f32 (T, 256)

    h = jnp.dot(h.astype(jnp.bfloat16), w2_ref[...],
                preferred_element_type=jnp.float32)
    h = jnp.maximum(h + b2_ref[...], 0.0)        # f32 (T, 256)

    h = jnp.dot(h.astype(jnp.bfloat16), w3_ref[...],
                preferred_element_type=jnp.float32)
    o_ref[...] = (h + b3_ref[...]).astype(o_ref.dtype)   # f32 (T, 128)


# ----------------------------------------------------------------------------
# Parameter packing (done once): zero-pad channels to 128 multiples, cast bf16
# ----------------------------------------------------------------------------
def pack_params(params):
    def padw(w, rp, cp):
        r, c = w.shape
        return jnp.pad(w, ((0, rp - r), (0, cp - c))).astype(jnp.bfloat16)

    def padb(b, cp):
        return jnp.pad(b, (0, cp - b.shape[0])).reshape(1, cp).astype(jnp.float32)

    return {
        "w1": padw(params["w1"], IN_DIM, H1P),
        "b1": padb(params["b1"], H1P),
        "w2": padw(params["w2"], H1P, H2P),   # zero rows kill the padded inputs
        "b2": padb(params["b2"], H2P),
        "w3": padw(params["w3"], H2P, OUTP),
        "b3": padb(params["b3"], OUTP),
    }


# ----------------------------------------------------------------------------
# Forward pass
# ----------------------------------------------------------------------------
@functools.partial(jax.jit, static_argnames=("row_tile",))
def cifar_2nn_forward(x, packed, *, row_tile=512):
    # x: (N, 3072) float32 (or (N,3,32,32)) -> (N, 10) float32
    x = x.reshape(x.shape[0], -1)
    N, K = x.shape
    assert K == IN_DIM

    # ----- row tile choice --------------------------------------------------
    n8 = _round_up(N, 8)
    tile = min(row_tile, n8)                 # (8,128)-aligned row tile
    # Give the "parallel" row axis >= 2 grid steps when the batch is large
    # enough (>= 512 rows) so v7x can shard it across its two TensorCores
    # without shrinking tiles below the HBM-roofline sweet spot (~256+ rows).
    if n8 // tile < 2 and n8 >= 512:
        tile = _round_up((n8 + 1) // 2, 8)
    n_pad = _round_up(N, tile)
    if n_pad != N:
        x = jnp.pad(x, ((0, n_pad - N), (0, 0)))   # batch padding only
    grid = (n_pad // tile,)

    # ----- explicit VMEM budget (per TensorCore) ----------------------------
    vmem_bytes = (
        2 * tile * IN_DIM * 4                                  # f32 x tile, 2 bufs
        + 2 * tile * OUTP * 4                                  # f32 out tile, 2 bufs
        + 2 * (IN_DIM * H1P + H1P * H2P + H2P * OUTP) * 2      # bf16 weights, 2 bufs
        + 2 * (H1P + H2P + OUTP) * 4                           # f32 biases
        + (6 << 20)                                            # scratch / spill headroom
    )
    vmem_limit = int(min(max(vmem_bytes, 32 << 20), 60 << 20))  # < v7x 64 MiB/TC

    out = pl.pallas_call(
        _mlp3_kernel,
        out_shape=jax.ShapeDtypeStruct((n_pad, OUTP), jnp.float32),
        grid=grid,
        in_specs=[
            pl.BlockSpec((tile, IN_DIM), lambda i: (i, 0)),
            pl.BlockSpec((IN_DIM, H1P), lambda i: (0, 0)),
            pl.BlockSpec((1, H1P), lambda i: (0, 0)),
            pl.BlockSpec((H1P, H2P), lambda i: (0, 0)),
            pl.BlockSpec((1, H2P), lambda i: (0, 0)),
            pl.BlockSpec((H2P, OUTP), lambda i: (0, 0)),
            pl.BlockSpec((1, OUTP), lambda i: (0, 0)),
        ],
        out_specs=pl.BlockSpec((tile, OUTP), lambda i: (i, 0)),
        compiler_params=pltpu.CompilerParams(
            dimension_semantics=("parallel",),
            vmem_limit_bytes=vmem_limit,
        ),
    )(x, packed["w1"], packed["b1"], packed["w2"], packed["b2"],
      packed["w3"], packed["b3"])

    return out[:N, :OUT]


# ----------------------------------------------------------------------------
# Deterministic synthetic parameters + pure-JAX f32 reference for validation
# ----------------------------------------------------------------------------
def init_params(key):
    ks = jax.random.split(key, 6)

    def w(k, shape, fan_in):
        return jax.random.normal(k, shape, jnp.float32) / jnp.sqrt(float(fan_in))

    return {
        "w1": w(ks[0], (IN_DIM, H1), IN_DIM),
        "b1": 0.01 * jax.random.normal(ks[1], (H1,), jnp.float32),
        "w2": w(ks[2], (H1, H2), H1),
        "b2": 0.01 * jax.random.normal(ks[3], (H2,), jnp.float32),
        "w3": w(ks[4], (H2, OUT), H2),
        "b3": 0.01 * jax.random.normal(ks[5], (OUT,), jnp.float32),
    }


def reference_forward(x, params):
    h = jax.nn.relu(x @ params["w1"] + params["b1"])
    h = jax.nn.relu(h @ params["w2"] + params["b2"])
    return h @ params["w3"] + params["b3"]


if __name__ == "__main__":
    key = jax.random.PRNGKey(0)
    pkey, xkey = jax.random.split(key)
    params = init_params(pkey)
    packed = pack_params(params)

    x = jax.random.normal(xkey, (4, IN_DIM), jnp.float32)   # small CIFAR-shaped batch

    out = jax.block_until_ready(cifar_2nn_forward(x, packed))
    assert out.shape == (4, OUT) and out.dtype == jnp.float32

    ref = jax.block_until_ready(reference_forward(x, params))
    # bf16 MXU inputs with f32 accumulation => small, bounded deviation from f32 ref.
    np.testing.assert_allclose(np.asarray(out), np.asarray(ref), rtol=5e-2, atol=5e-2)

    print("KERNEL_OK")
</pallas_src>

<mosaic_0001>
module attributes {stable_mosaic.version = 11 : i64} {
  func.func @_mlp3_kernel(%arg0: i32, %arg1: memref<8x3072xf32, #tpu.memory_space<vmem>>, %arg2: memref<3072x256xbf16, #tpu.memory_space<vmem>>, %arg3: memref<1x256xf32, #tpu.memory_space<vmem>>, %arg4: memref<256x256xbf16, #tpu.memory_space<vmem>>, %arg5: memref<1x256xf32, #tpu.memory_space<vmem>>, %arg6: memref<256x128xbf16, #tpu.memory_space<vmem>>, %arg7: memref<1x128xf32, #tpu.memory_space<vmem>>, %arg8: memref<8x128xf32, #tpu.memory_space<vmem>>) attributes {dimension_semantics = [#tpu.dimension_semantics<parallel>], iteration_bounds = array<i64: 1>, scalar_prefetch = 0 : i64, scratch_operands = 0 : i64, tpu.core_type = #tpu.core_type<tc>, window_params = [{transform_indices = @transform_0, window_bounds = array<i64: 8, 3072>}, {pipeline_mode = #tpu.pipeline_mode<synchronous>, transform_indices = @transform_1, window_bounds = array<i64: 3072, 256>}, {pipeline_mode = #tpu.pipeline_mode<synchronous>, transform_indices = @transform_2, window_bounds = array<i64: 1, 256>}, {pipeline_mode = #tpu.pipeline_mode<synchronous>, transform_indices = @transform_3, window_bounds = array<i64: 256, 256>}, {pipeline_mode = #tpu.pipeline_mode<synchronous>, transform_indices = @transform_4, window_bounds = array<i64: 1, 256>}, {pipeline_mode = #tpu.pipeline_mode<synchronous>, transform_indices = @transform_5, window_bounds = array<i64: 256, 128>}, {pipeline_mode = #tpu.pipeline_mode<synchronous>, transform_indices = @transform_6, window_bounds = array<i64: 1, 128>}, {transform_indices = @transform_7, window_bounds = array<i64: 8, 128>}]} {
    %c0 = arith.constant 0 : index
    %c0_0 = arith.constant 0 : index
    %0 = vector.load %arg1[%c0, %c0_0] : memref<8x3072xf32, #tpu.memory_space<vmem>>, vector<8x3072xf32>
    %1 = arith.truncf %0 : vector<8x3072xf32> to vector<8x3072xbf16>
    %c0_1 = arith.constant 0 : index
    %c0_2 = arith.constant 0 : index
    %2 = vector.load %arg2[%c0_1, %c0_2] : memref<3072x256xbf16, #tpu.memory_space<vmem>>, vector<3072x256xbf16>
    %cst = arith.constant dense<0.000000e+00> : vector<8x256xf32>
    %3 = tpu.matmul %1, %2, %cst {dimension_numbers = #tpu.dot_dimension_numbers<[1], [0], [0], [1], [0, 0, 1, 1], [], []>} : vector<8x3072xbf16>, vector<3072x256xbf16>, vector<8x256xf32> -> vector<8x256xf32>
    %c0_3 = arith.constant 0 : index
    %c0_4 = arith.constant 0 : index
    %4 = vector.load %arg3[%c0_3, %c0_4] : memref<1x256xf32, #tpu.memory_space<vmem>>, vector<1x256xf32>
    %5 = vector.broadcast %4 : vector<1x256xf32> to vector<8x256xf32>
    %6 = arith.addf %3, %5 : vector<8x256xf32>
    %cst_5 = arith.constant 0.000000e+00 : f32
    %7 = vector.broadcast %cst_5 : f32 to vector<8x256xf32>
    %8 = arith.maximumf %6, %7 : vector<8x256xf32>
    %9 = arith.truncf %8 : vector<8x256xf32> to vector<8x256xbf16>
    %c0_6 = arith.constant 0 : index
    %c0_7 = arith.constant 0 : index
    %10 = vector.load %arg4[%c0_6, %c0_7] : memref<256x256xbf16, #tpu.memory_space<vmem>>, vector<256x256xbf16>
    %cst_8 = arith.constant dense<0.000000e+00> : vector<8x256xf32>
    %11 = tpu.matmul %9, %10, %cst_8 {dimension_numbers = #tpu.dot_dimension_numbers<[1], [0], [0], [1], [0, 0, 1, 1], [], []>} : vector<8x256xbf16>, vector<256x256xbf16>, vector<8x256xf32> -> vector<8x256xf32>
    %c0_9 = arith.constant 0 : index
    %c0_10 = arith.constant 0 : index
    %12 = vector.load %arg5[%c0_9, %c0_10] : memref<1x256xf32, #tpu.memory_space<vmem>>, vector<1x256xf32>
    %13 = vector.broadcast %12 : vector<1x256xf32> to vector<8x256xf32>
    %14 = arith.addf %11, %13 : vector<8x256xf32>
    %cst_11 = arith.constant 0.000000e+00 : f32
    %15 = vector.broadcast %cst_11 : f32 to vector<8x256xf32>
    %16 = arith.maximumf %14, %15 : vector<8x256xf32>
    %17 = arith.truncf %16 : vector<8x256xf32> to vector<8x256xbf16>
    %c0_12 = arith.constant 0 : index
    %c0_13 = arith.constant 0 : index
    %18 = vector.load %arg6[%c0_12, %c0_13] : memref<256x128xbf16, #tpu.memory_space<vmem>>, vector<256x128xbf16>
    %cst_14 = arith.constant dense<0.000000e+00> : vector<8x128xf32>
    %19 = tpu.matmul %17, %18, %cst_14 {dimension_numbers = #tpu.dot_dimension_numbers<[1], [0], [0], [1], [0, 0, 1, 1], [], []>} : vector<8x256xbf16>, vector<256x128xbf16>, vector<8x128xf32> -> vector<8x128xf32>
    %c0_15 = arith.constant 0 : index
    %c0_16 = arith.constant 0 : index
    %20 = vector.load %arg7[%c0_15, %c0_16] : memref<1x128xf32, #tpu.memory_space<vmem>>, vector<1x128xf32>
    %21 = vector.broadcast %20 : vector<1x128xf32> to vector<8x128xf32>
    %22 = arith.addf %19, %21 : vector<8x128xf32>
    %c0_17 = arith.constant 0 : index
    %c0_18 = arith.constant 0 : index
    %23 = vector.load %arg8[%c0_17, %c0_18] : memref<8x128xf32, #tpu.memory_space<vmem>>, vector<8x128xf32>
    tpu.vector_store %arg8[%c0_17, %c0_18], %22 {strides = array<i32>} : memref<8x128xf32, #tpu.memory_space<vmem>>, vector<8x128xf32>,
    return
  }
  func.func @transform_0(%arg0: i32) -> (i32, i32) {
    %c0_i32 = arith.constant 0 : i32
    %c0_i32_0 = arith.constant 0 : i32
    return %arg0, %c0_i32 : i32, i32
  }
  func.func @transform_1(%arg0: i32) -> (i32, i32) {
    %c0_i32 = arith.constant 0 : i32
    %c0_i32_0 = arith.constant 0 : i32
    %c0_i32_1 = arith.constant 0 : i32
    return %c0_i32, %c0_i32_0 : i32, i32
  }
  func.func @transform_2(%arg0: i32) -> (i32, i32) {
    %c0_i32 = arith.constant 0 : i32
    %c0_i32_0 = arith.constant 0 : i32
    %c0_i32_1 = arith.constant 0 : i32
    return %c0_i32, %c0_i32_0 : i32, i32
  }
  func.func @transform_3(%arg0: i32) -> (i32, i32) {
    %c0_i32 = arith.constant 0 : i32
    %c0_i32_0 = arith.constant 0 : i32
    %c0_i32_1 = arith.constant 0 : i32
    return %c0_i32, %c0_i32_0 : i32, i32
  }
  func.func @transform_4(%arg0: i32) -> (i32, i32) {
    %c0_i32 = arith.constant 0 : i32
    %c0_i32_0 = arith.constant 0 : i32
    %c0_i32_1 = arith.constant 0 : i32
    return %c0_i32, %c0_i32_0 : i32, i32
  }
  func.func @transform_5(%arg0: i32) -> (i32, i32) {
    %c0_i32 = arith.constant 0 : i32
    %c0_i32_0 = arith.constant 0 : i32
    %c0_i32_1 = arith.constant 0 : i32
    return %c0_i32, %c0_i32_0 : i32, i32
  }
  func.func @transform_6(%arg0: i32) -> (i32, i32) {
    %c0_i32 = arith.constant 0 : i32
    %c0_i32_0 = arith.constant 0 : i32
    %c0_i32_1 = arith.constant 0 : i32
    return %c0_i32, %c0_i32_0 : i32, i32
  }
  func.func @transform_7(%arg0: i32) -> (i32, i32) {
    %c0_i32 = arith.constant 0 : i32
    %c0_i32_0 = arith.constant 0 : i32
    return %arg0, %c0_i32 : i32, i32
  }
}

</mosaic_0001>

<llo_original>
// kernel: cifar_2nn_forward.1
$region0: #{cifar_2nn_forward.1}
  #allocation0 [shape = 'u32[]', space=smem, size = 0x4, offset = 0x4, fixed_abs, tag = 'smem constant byte address 0x4 - core index']
  #allocation1 [shape = 'u32[72,128]{1,0:T(1,128)}', space=vmem, size = 0x9000, scoped, tag = 'internal scratch']
  %s0 = inlined_call_operand.vmem [shape: f32[8,3072], index: 0, kind: input, shape index: {}]
  %s1 = inlined_call_operand.hbm [shape: bf16[3072,256], index: 1, kind: input, shape index: {}]
  %s2 = inlined_call_operand.hbm [shape: f32[1,256], index: 2, kind: input, shape index: {}]
  %s3 = inlined_call_operand.hbm [shape: bf16[256,256], index: 3, kind: input, shape index: {}]
  %s4 = inlined_call_operand.hbm [shape: f32[1,256], index: 4, kind: input, shape index: {}]
  %s5 = inlined_call_operand.hbm [shape: bf16[256,128], index: 5, kind: input, shape index: {}]
  %s6 = inlined_call_operand.hbm [shape: f32[1,128], index: 6, kind: input, shape index: {}]
  %s7 = inlined_call_operand.vmem [shape: f32[8,128], index: 7, kind: output, shape index: {}]
  %s8 = sld [smem:[#allocation0]]
  $region62: #{cifar_2nn_forward.1} parent=0
    _
  %s10 = ssub.s32 1, %s8
  %s11 = scalar_select 0, %s10, %s8
  $region1: #{cifar_2nn_forward.1} parent=0
    #allocation2 [shape = 'u8[1572864]{0}', space=vmem, size = 0x180000, scoped, tag = 'input window, operand 1, single buffered']
    #allocation3 [shape = 's32[1]{0}', space=sflag, size = 0x4, scoped, tag = 'scoped memory for cifar_2nn_forward.1']
    #allocation4 [shape = 'u8[1024]{0}', space=vmem, size = 0x400, scoped, tag = 'input window, operand 2, single buffered']
    #allocation5 [shape = 's32[1]{0}', space=sflag, size = 0x4, scoped, tag = 'scoped memory for cifar_2nn_forward.1']
    #allocation6 [shape = 'u8[131072]{0}', space=vmem, size = 0x20000, scoped, tag = 'input window, operand 3, single buffered']
    #allocation7 [shape = 'u8[1024]{0}', space=vmem, size = 0x400, scoped, tag = 'input window, operand 4, single buffered']
    #allocation8 [shape = 's32[1]{0}', space=sflag, size = 0x4, scoped, tag = 'scoped memory for cifar_2nn_forward.1']
    #allocation9 [shape = 'u8[65536]{0}', space=vmem, size = 0x10000, scoped, tag = 'input window, operand 5, single buffered']
    #allocation10 [shape = 'u8[512]{0}', space=vmem, size = 0x400, scoped, tag = 'input window, operand 6, single buffered']
    #allocation11 [shape = 's32[1]{0}', space=sflag, size = 0x4, scoped, tag = 'scoped memory for cifar_2nn_forward.1']
    %12 = vsyncpa [#allocation3], 0
    %13 = vsyncpa [#allocation5], 0
    %14 = vsyncpa [#allocation8], 0
    %15 = vsyncpa [#allocation11], 0
    // Predicated region
    $region2: #{cifar_2nn_forward.1} parent=1 // pred_check
      _
    $region3: #{cifar_2nn_forward.1} parent=1 // pred_check_branch
      %17 = sbr.rel (0) target = $region5
    $region4: #{cifar_2nn_forward.1} parent=1 // pred_region
      _
    $region5: #{cifar_2nn_forward.1} parent=1 // pred_fallthru
      _
    // Predicated region
    $region6: #{cifar_2nn_forward.1} parent=1 // pred_check
      _
    $region7: #{cifar_2nn_forward.1} parent=1 // pred_check_branch
      %19 = sbr.rel (0) target = $region9
    $region8: #{cifar_2nn_forward.1} parent=1 // pred_region
      %21 = vsyncadd [#allocation3], 0
      %s22 = sshll.u32 %s1, 4
      %s23 = int_to_ptr.hbm [resolvable:$true] %s22
      %s24 = sshll.u32 [#allocation2], 4
      %s25 = int_to_ptr.vmem [resolvable:$true] %s24
      %30 = dma.hbm_to_vmem [thread:$0]  %s23, 49152, %s25, [#allocation3], 128, 128, 8
    $region9: #{cifar_2nn_forward.1} parent=1 // pred_fallthru
      _
    // Predicated region
    $region10: #{cifar_2nn_forward.1} parent=1 // pred_check
      _
    $region11: #{cifar_2nn_forward.1} parent=1 // pred_check_branch
      %32 = sbr.rel (0) target = $region13
    $region12: #{cifar_2nn_forward.1} parent=1 // pred_region
      %34 = vsyncadd [#allocation5], 0
      %s36 = sshll.u32 %s2, 4
      %s37 = int_to_ptr.hbm [resolvable:$true] %s36
      %s38 = sshll.u32 [#allocation4], 4
      %s39 = int_to_ptr.vmem [resolvable:$true] %s38
      %41 = dma.hbm_to_vmem [thread:$0]  %s37, 32, %s39, [#allocation5]
    $region13: #{cifar_2nn_forward.1} parent=1 // pred_fallthru
      _
    // Predicated region
    $region14: #{cifar_2nn_forward.1} parent=1 // pred_check
      _
    $region15: #{cifar_2nn_forward.1} parent=1 // pred_check_branch
      %43 = sbr.rel (0) target = $region17
    $region16: #{cifar_2nn_forward.1} parent=1 // pred_region
      %45 = vsyncadd [#allocation5], 0
      %s46 = sshll.u32 %s3, 4
      %s47 = int_to_ptr.hbm [resolvable:$true] %s46
      %s48 = sshll.u32 [#allocation6], 4
      %s49 = int_to_ptr.vmem [resolvable:$true] %s48
      %54 = dma.hbm_to_vmem [thread:$0]  %s47, 4096, %s49, [#allocation5], 128, 128, 8
    $region17: #{cifar_2nn_forward.1} parent=1 // pred_fallthru
      _
    // Predicated region
    $region18: #{cifar_2nn_forward.1} parent=1 // pred_check
      _
    $region19: #{cifar_2nn_forward.1} parent=1 // pred_check_branch
      %56 = sbr.rel (0) target = $region21
    $region20: #{cifar_2nn_forward.1} parent=1 // pred_region
      %58 = vsyncadd [#allocation8], 0
      %s60 = sshll.u32 %s4, 4
      %s61 = int_to_ptr.hbm [resolvable:$true] %s60
      %s62 = sshll.u32 [#allocation7], 4
      %s63 = int_to_ptr.vmem [resolvable:$true] %s62
      %65 = dma.hbm_to_vmem [thread:$0]  %s61, 32, %s63, [#allocation8]
    $region21: #{cifar_2nn_forward.1} parent=1 // pred_fallthru
      _
    // Predicated region
    $region22: #{cifar_2nn_forward.1} parent=1 // pred_check
      _
    $region23: #{cifar_2nn_forward.1} parent=1 // pred_check_branch
      %67 = sbr.rel (0) target = $region25
    $region24: #{cifar_2nn_forward.1} parent=1 // pred_region
      %69 = vsyncadd [#allocation8], 0
      %s70 = sshll.u32 %s5, 4
      %s71 = int_to_ptr.hbm [resolvable:$true] %s70
      %s72 = sshll.u32 [#allocation9], 4
      %s73 = int_to_ptr.vmem [resolvable:$true] %s72
      %78 = dma.hbm_to_vmem [thread:$0]  %s71, 2048, %s73, [#allocation8], 64, 64, 4
    $region25: #{cifar_2nn_forward.1} parent=1 // pred_fallthru
      _
    // Predicated region
    $region26: #{cifar_2nn_forward.1} parent=1 // pred_check
      _
    $region27: #{cifar_2nn_forward.1} parent=1 // pred_check_branch
      %80 = sbr.rel (0) target = $region29
    $region28: #{cifar_2nn_forward.1} parent=1 // pred_region
      %82 = vsyncadd [#allocation11], 0
      %s84 = sshll.u32 %s6, 4
      %s85 = int_to_ptr.hbm [resolvable:$true] %s84
      %s86 = sshll.u32 [#allocation10], 4
      %s87 = int_to_ptr.vmem [resolvable:$true] %s86
      %89 = dma.hbm_to_vmem [thread:$0]  %s85, 16, %s87, [#allocation11]
    $region29: #{cifar_2nn_forward.1} parent=1 // pred_fallthru
      _
    // Predicated region
    $region30: #{cifar_2nn_forward.1} parent=1 // pred_check
      _
    $region31: #{cifar_2nn_forward.1} parent=1 // pred_check_branch
      %91 = sbr.rel (0) target = $region33
    $region32: #{cifar_2nn_forward.1} parent=1 // pred_region
      %93 = dma.done [#allocation3], 49152
    $region33: #{cifar_2nn_forward.1} parent=1 // pred_fallthru
      _
    // Predicated region
    $region34: #{cifar_2nn_forward.1} parent=1 // pred_check
      _
    $region35: #{cifar_2nn_forward.1} parent=1 // pred_check_branch
      %95 = sbr.rel (0) target = $region37
    $region36: #{cifar_2nn_forward.1} parent=1 // pred_region
      %97 = dma.done [#allocation5], 32
    $region37: #{cifar_2nn_forward.1} parent=1 // pred_fallthru
      _
    // Predicated region
    $region38: #{cifar_2nn_forward.1} parent=1 // pred_check
      _
    $region39: #{cifar_2nn_forward.1} parent=1 // pred_check_branch
      %99 = sbr.rel (0) target = $region41
    $region40: #{cifar_2nn_forward.1} parent=1 // pred_region
      %101 = dma.done [#allocation5], 4096
    $region41: #{cifar_2nn_forward.1} parent=1 // pred_fallthru
      _
    // Predicated region
    $region42: #{cifar_2nn_forward.1} parent=1 // pred_check
      _
    $region43: #{cifar_2nn_forward.1} parent=1 // pred_check_branch
      %103 = sbr.rel (0) target = $region45
    $region44: #{cifar_2nn_forward.1} parent=1 // pred_region
      %105 = dma.done [#allocation8], 32
    $region45: #{cifar_2nn_forward.1} parent=1 // pred_fallthru
      _
    // Predicated region
    $region46: #{cifar_2nn_forward.1} parent=1 // pred_check
      _
    $region47: #{cifar_2nn_forward.1} parent=1 // pred_check_branch
      %107 = sbr.rel (0) target = $region49
    $region48: #{cifar_2nn_forward.1} parent=1 // pred_region
      %109 = dma.done [#allocation8], 2048
    $region49: #{cifar_2nn_forward.1} parent=1 // pred_fallthru
      _
    // Predicated region
    $region50: #{cifar_2nn_forward.1} parent=1 // pred_check
      _
    $region51: #{cifar_2nn_forward.1} parent=1 // pred_check_branch
      %111 = sbr.rel (0) target = $region53
    $region52: #{cifar_2nn_forward.1} parent=1 // pred_region
      %113 = dma.done [#allocation11], 16
    $region53: #{cifar_2nn_forward.1} parent=1 // pred_fallthru
      _
    %v114 = vld [vmem:[%s0] sm:$0xff]
    %v115 = vld [vmem:[%s0 + $0x8] sm:$0xff]
    %v116 = vld [vmem:[%s0 + $0x10] sm:$0xff]
    %v117 = vld [vmem:[%s0 + $0x18] sm:$0xff]
    %v118 = vld [vmem:[%s0 + $0x20] sm:$0xff]
    %v119 = vld [vmem:[%s0 + $0x28] sm:$0xff]
    %v120 = vld [vmem:[%s0 + $0x30] sm:$0xff]
    %v121 = vld [vmem:[%s0 + $0x38] sm:$0xff]
    %v122 = vld [vmem:[%s0 + $0x40] sm:$0xff]
    %v123 = vld [vmem:[%s0 + $0x48] sm:$0xff]
    %v124 = vld [vmem:[%s0 + $0x50] sm:$0xff]
    %v125 = vld [vmem:[%s0 + $0x58] sm:$0xff]
    %v126 = vld [vmem:[%s0 + $0x60] sm:$0xff]
    %v127 = vld [vmem:[%s0 + $0x68] sm:$0xff]
    %v128 = vld [vmem:[%s0 + $0x70] sm:$0xff]
    %v129 = vld [vmem:[%s0 + $0x78] sm:$0xff]
    %v130 = vld [vmem:[%s0 + $0x80] sm:$0xff]
    %v131 = vld [vmem:[%s0 + $0x88] sm:$0xff]
    %v132 = vld [vmem:[%s0 + $0x90] sm:$0xff]
    %v133 = vld [vmem:[%s0 + $0x98] sm:$0xff]
    %v134 = vld [vmem:[%s0 + $0xa0] sm:$0xff]
    %v135 = vld [vmem:[%s0 + $0xa8] sm:$0xff]
    %v136 = vld [vmem:[%s0 + $0xb0] sm:$0xff]
    %v137 = vld [vmem:[%s0 + $0xb8] sm:$0xff]
    %v138 = vpack.c.bf16 %v114, %v114
    %v139 = vpack.c.bf16 %v115, %v115
    %v140 = vpack.c.bf16 %v116, %v116
    %v141 = vpack.c.bf16 %v117, %v117
    %v142 = vpack.c.bf16 %v118, %v118
    %v143 = vpack.c.bf16 %v119, %v119
    %v144 = vpack.c.bf16 %v120, %v120
    %v145 = vpack.c.bf16 %v121, %v121
    %v146 = vpack.c.bf16 %v122, %v122
    %v147 = vpack.c.bf16 %v123, %v123
    %v148 = vpack.c.bf16 %v124, %v124
    %v149 = vpack.c.bf16 %v125, %v125
    %v150 = vpack.c.bf16 %v126, %v126
    %v151 = vpack.c.bf16 %v127, %v127
    %v152 = vpack.c.bf16 %v128, %v128
    %v153 = vpack.c.bf16 %v129, %v129
    %v154 = vpack.c.bf16 %v130, %v130
    %v155 = vpack.c.bf16 %v131, %v131
    %v156 = vpack.c.bf16 %v132, %v132
    %v157 = vpack.c.bf16 %v133, %v133
    %v158 = vpack.c.bf16 %v134, %v134
    %v159 = vpack.c.bf16 %v135, %v135
    %v160 = vpack.c.bf16 %v136, %v136
    %v161 = vpack.c.bf16 %v137, %v137
    %v162 = vld [vmem:[#allocation2] sm:$0xff]
    %v163 = vld [vmem:[#allocation2 + $0x8] sm:$0xff]
    %v164 = vld [vmem:[#allocation2 + $0x10] sm:$0xff]
    %v165 = vld [vmem:[#allocation2 + $0x18] sm:$0xff]
    %v166 = vld [vmem:[#allocation2 + $0x20] sm:$0xff]
    %v167 = vld [vmem:[#allocation2 + $0x28] sm:$0xff]
    %v168 = vld [vmem:[#allocation2 + $0x30] sm:$0xff]
    %v169 = vld [vmem:[#allocation2 + $0x38] sm:$0xff]
    %v170 = vld [vmem:[#allocation2 + $0x40] sm:$0xff]
    %v171 = vld [vmem:[#allocation2 + $0x48] sm:$0xff]
    %v172 = vld [vmem:[#allocation2 + $0x50] sm:$0xff]
    %v173 = vld [vmem:[#allocation2 + $0x58] sm:$0xff]
    %v174 = vld [vmem:[#allocation2 + $0x60] sm:$0xff]
    %v175 = vld [vmem:[#allocation2 + $0x68] sm:$0xff]
    %v176 = vld [vmem:[#allocation2 + $0x70] sm:$0xff]
    %v177 = vld [vmem:[#allocation2 + $0x78] sm:$0xff]
    %v178 = vld [vmem:[#allocation2 + $0x80] sm:$0xff]
    %v179 = vld [vmem:[#allocation2 + $0x88] sm:$0xff]
    %v180 = vld [vmem:[#allocation2 + $0x90] sm:$0xff]
    %v181 = vld [vmem:[#allocation2 + $0x98] sm:$0xff]
    %v182 = vld [vmem:[#allocation2 + $0xa0] sm:$0xff]
    %v183 = vld [vmem:[#allocation2 + $0xa8] sm:$0xff]
    %v184 = vld [vmem:[#allocation2 + $0xb0] sm:$0xff]
    %v185 = vld [vmem:[#allocation2 + $0xb8] sm:$0xff]
    %v186 = vld [vmem:[#allocation2 + $0xc0] sm:$0xff]
    %v187 = vld [vmem:[#allocation2 + $0xc8] sm:$0xff]
    %v188 = vld [vmem:[#allocation2 + $0xd0] sm:$0xff]
    %v189 = vld [vmem:[#allocation2 + $0xd8] sm:$0xff]
    %v190 = vld [vmem:[#allocation2 + $0xe0] sm:$0xff]
    %v191 = vld [vmem:[#allocation2 + $0xe8] sm:$0xff]
    %v192 = vld [vmem:[#allocation2 + $0xf0] sm:$0xff]
    %v193 = vld [vmem:[#allocation2 + $0xf8] sm:$0xff]
    %v194 = vld [vmem:[#allocation2 + $0x100] sm:$0xff]
    %v195 = vld [vmem:[#allocation2 + $0x108] sm:$0xff]
    %v196 = vld [vmem:[#allocation2 + $0x110] sm:$0xff]
    %v197 = vld [vmem:[#allocation2 + $0x118] sm:$0xff]
    %v198 = vld [vmem:[#allocation2 + $0x120] sm:$0xff]
    %v199 = vld [vmem:[#allocation2 + $0x128] sm:$0xff]
    %v200 = vld [vmem:[#allocation2 + $0x130] sm:$0xff]
    %v201 = vld [vmem:[#allocation2 + $0x138] sm:$0xff]
    %v202 = vld [vmem:[#allocation2 + $0x140] sm:$0xff]
    %v203 = vld [vmem:[#allocation2 + $0x148] sm:$0xff]
    %v204 = vld [vmem:[#allocation2 + $0x150] sm:$0xff]
    %v205 = vld [vmem:[#allocation2 + $0x158] sm:$0xff]
    %v206 = vld [vmem:[#allocation2 + $0x160] sm:$0xff]
    %v207 = vld [vmem:[#allocation2 + $0x168] sm:$0xff]
    %v208 = vld [vmem:[#allocation2 + $0x170] sm:$0xff]
    %v209 = vld [vmem:[#allocation2 + $0x178] sm:$0xff]
    %v210 = vld [vmem:[#allocation2 + $0x180] sm:$0xff]
    %v211 = vld [vmem:[#allocation2 + $0x188] sm:$0xff]
    %v212 = vld [vmem:[#allocation2 + $0x190] sm:$0xff]
    %v213 = vld [vmem:[#allocation2 + $0x198] sm:$0xff]
    %v214 = vld [vmem:[#allocation2 + $0x1a0] sm:$0xff]
    %v215 = vld [vmem:[#allocation2 + $0x1a8] sm:$0xff]
    %v216 = vld [vmem:[#allocation2 + $0x1b0] sm:$0xff]
    %v217 = vld [vmem:[#allocation2 + $0x1b8] sm:$0xff]
    %v218 = vld [vmem:[#allocation2 + $0x1c0] sm:$0xff]
    %v219 = vld [vmem:[#allocation2 + $0x1c8] sm:$0xff]
    %v220 = vld [vmem:[#allocation2 + $0x1d0] sm:$0xff]
    %v221 = vld [vmem:[#allocation2 + $0x1d8] sm:$0xff]
    %v222 = vld [vmem:[#allocation2 + $0x1e0] sm:$0xff]
    %v223 = vld [vmem:[#allocation2 + $0x1e8] sm:$0xff]
    %v224 = vld [vmem:[#allocation2 + $0x1f0] sm:$0xff]
    %v225 = vld [vmem:[#allocation2 + $0x1f8] sm:$0xff]
    %v226 = vld [vmem:[#allocation2 + $0x200] sm:$0xff]
    %v227 = vld [vmem:[#allocation2 + $0x208] sm:$0xff]
    %v228 = vld [vmem:[#allocation2 + $0x210] sm:$0xff]
    %v229 = vld [vmem:[#allocation2 + $0x218] sm:$0xff]
    %v230 = vld [vmem:[#allocation2 + $0x220] sm:$0xff]
    %v231 = vld [vmem:[#allocation2 + $0x228] sm:$0xff]
    %v232 = vld [vmem:[#allocation2 + $0x230] sm:$0xff]
    %v233 = vld [vmem:[#allocation2 + $0x238] sm:$0xff]
    %v234 = vld [vmem:[#allocation2 + $0x240] sm:$0xff]
    %v235 = vld [vmem:[#allocation2 + $0x248] sm:$0xff]
    %v236 = vld [vmem:[#allocation2 + $0x250] sm:$0xff]
    %v237 = vld [vmem:[#allocation2 + $0x258] sm:$0xff]
    %v238 = vld [vmem:[#allocation2 + $0x260] sm:$0xff]
    %v239 = vld [vmem:[#allocation2 + $0x268] sm:$0xff]
    %v240 = vld [vmem:[#allocation2 + $0x270] sm:$0xff]
    %v241 = vld [vmem:[#allocation2 + $0x278] sm:$0xff]
    %v242 = vld [vmem:[#allocation2 + $0x280] sm:$0xff]
    %v243 = vld [vmem:[#allocation2 + $0x288] sm:$0xff]
    %v244 = vld [vmem:[#allocation2 + $0x290] sm:$0xff]
    %v245 = vld [vmem:[#allocation2 + $0x298] sm:$0xff]
    %v246 = vld [vmem:[#allocation2 + $0x2a0] sm:$0xff]
    %v247 = vld [vmem:[#allocation2 + $0x2a8] sm:$0xff]
    %v248 = vld [vmem:[#allocation2 + $0x2b0] sm:$0xff]
    %v249 = vld [vmem:[#allocation2 + $0x2b8] sm:$0xff]
    %v250 = vld [vmem:[#allocation2 + $0x2c0] sm:$0xff]
    %v251 = vld [vmem:[#allocation2 + $0x2c8] sm:$0xff]
    %v252 = vld [vmem:[#allocation2 + $0x2d0] sm:$0xff]
    %v253 = vld [vmem:[#allocation2 + $0x2d8] sm:$0xff]
    %v254 = vld [vmem:[#allocation2 + $0x2e0] sm:$0xff]
    %v255 = vld [vmem:[#allocation2 + $0x2e8] sm:$0xff]
    %v256 = vld [vmem:[#allocation2 + $0x2f0] sm:$0xff]
    %v257 = vld [vmem:[#allocation2 + $0x2f8] sm:$0xff]
    %v258 = vld [vmem:[#allocation2 + $0x300] sm:$0xff]
    %v259 = vld [vmem:[#allocation2 + $0x308] sm:$0xff]
    %v260 = vld [vmem:[#allocation2 + $0x310] sm:$0xff]
    %v261 = vld [vmem:[#allocation2 + $0x318] sm:$0xff]
    %v262 = vld [vmem:[#allocation2 + $0x320] sm:$0xff]
    %v263 = vld [vmem:[#allocation2 + $0x328] sm:$0xff]
    %v264 = vld [vmem:[#allocation2 + $0x330] sm:$0xff]
    %v265 = vld [vmem:[#allocation2 + $0x338] sm:$0xff]
    %v266 = vld [vmem:[#allocation2 + $0x340] sm:$0xff]
    %v267 = vld [vmem:[#allocation2 + $0x348] sm:$0xff]
    %v268 = vld [vmem:[#allocation2 + $0x350] sm:$0xff]
    %v269 = vld [vmem:[#allocation2 + $0x358] sm:$0xff]
    %v270 = vld [vmem:[#allocation2 + $0x360] sm:$0xff]
    %v271 = vld [vmem:[#allocation2 + $0x368] sm:$0xff]
    %v272 = vld [vmem:[#allocation2 + $0x370] sm:$0xff]
    %v273 = vld [vmem:[#allocation2 + $0x378] sm:$0xff]
    %v274 = vld [vmem:[#allocation2 + $0x380] sm:$0xff]
    %v275 = vld [vmem:[#allocation2 + $0x388] sm:$0xff]
    %v276 = vld [vmem:[#allocation2 + $0x390] sm:$0xff]
    %v277 = vld [vmem:[#allocation2 + $0x398] sm:$0xff]
    %v278 = vld [vmem:[#allocation2 + $0x3a0] sm:$0xff]
    %v279 = vld [vmem:[#allocation2 + $0x3a8] sm:$0xff]
    %v280 = vld [vmem:[#allocation2 + $0x3b0] sm:$0xff]
    %v281 = vld [vmem:[#allocation2 + $0x3b8] sm:$0xff]
    %v282 = vld [vmem:[#allocation2 + $0x3c0] sm:$0xff]
    %v283 = vld [vmem:[#allocation2 + $0x3c8] sm:$0xff]
    %v284 = vld [vmem:[#allocation2 + $0x3d0] sm:$0xff]
    %v285 = vld [vmem:[#allocation2 + $0x3d8] sm:$0xff]
    %v286 = vld [vmem:[#allocation2 + $0x3e0] sm:$0xff]
    %v287 = vld [vmem:[#allocation2 + $0x3e8] sm:$0xff]
    %v288 = vld [vmem:[#allocation2 + $0x3f0] sm:$0xff]
    %v289 = vld [vmem:[#allocation2 + $0x3f8] sm:$0xff]
    %v290 = vld [vmem:[#allocation2 + $0x400] sm:$0xff]
    %v291 = vld [vmem:[#allocation2 + $0x408] sm:$0xff]
    %v292 = vld [vmem:[#allocation2 + $0x410] sm:$0xff]
    %v293 = vld [vmem:[#allocation2 + $0x418] sm:$0xff]
    %v294 = vld [vmem:[#allocation2 + $0x420] sm:$0xff]
    %v295 = vld [vmem:[#allocation2 + $0x428] sm:$0xff]
    %v296 = vld [vmem:[#allocation2 + $0x430] sm:$0xff]
    %v297 = vld [vmem:[#allocation2 + $0x438] sm:$0xff]
    %v298 = vld [vmem:[#allocation2 + $0x440] sm:$0xff]
    %v299 = vld [vmem:[#allocation2 + $0x448] sm:$0xff]
    %v300 = vld [vmem:[#allocation2 + $0x450] sm:$0xff]
    %v301 = vld [vmem:[#allocation2 + $0x458] sm:$0xff]
    %v302 = vld [vmem:[#allocation2 + $0x460] sm:$0xff]
    %v303 = vld [vmem:[#allocation2 + $0x468] sm:$0xff]
    %v304 = vld [vmem:[#allocation2 + $0x470] sm:$0xff]
    %v305 = vld [vmem:[#allocation2 + $0x478] sm:$0xff]
    %v306 = vld [vmem:[#allocation2 + $0x480] sm:$0xff]
    %v307 = vld [vmem:[#allocation2 + $0x488] sm:$0xff]
    %v308 = vld [vmem:[#allocation2 + $0x490] sm:$0xff]
    %v309 = vld [vmem:[#allocation2 + $0x498] sm:$0xff]
    %v310 = vld [vmem:[#allocation2 + $0x4a0] sm:$0xff]
    %v311 = vld [vmem:[#allocation2 + $0x4a8] sm:$0xff]
    %v312 = vld [vmem:[#allocation2 + $0x4b0] sm:$0xff]
    %v313 = vld [vmem:[#allocation2 + $0x4b8] sm:$0xff]
    %v314 = vld [vmem:[#allocation2 + $0x4c0] sm:$0xff]
    %v315 = vld [vmem:[#allocation2 + $0x4c8] sm:$0xff]
    %v316 = vld [vmem:[#allocation2 + $0x4d0] sm:$0xff]
    %v317 = vld [vmem:[#allocation2 + $0x4d8] sm:$0xff]
    %v318 = vld [vmem:[#allocation2 + $0x4e0] sm:$0xff]
    %v319 = vld [vmem:[#allocation2 + $0x4e8] sm:$0xff]
    %v320 = vld [vmem:[#allocation2 + $0x4f0] sm:$0xff]
    %v321 = vld [vmem:[#allocation2 + $0x4f8] sm:$0xff]
    %v322 = vld [vmem:[#allocation2 + $0x500] sm:$0xff]
    %v323 = vld [vmem:[#allocation2 + $0x508] sm:$0xff]
    %v324 = vld [vmem:[#allocation2 + $0x510] sm:$0xff]
    %v325 = vld [vmem:[#allocation2 + $0x518] sm:$0xff]
    %v326 = vld [vmem:[#allocation2 + $0x520] sm:$0xff]
    %v327 = vld [vmem:[#allocation2 + $0x528] sm:$0xff]
    %v328 = vld [vmem:[#allocation2 + $0x530] sm:$0xff]
    %v329 = vld [vmem:[#allocation2 + $0x538] sm:$0xff]
    %v330 = vld [vmem:[#allocation2 + $0x540] sm:$0xff]
    %v331 = vld [vmem:[#allocation2 + $0x548] sm:$0xff]
    %v332 = vld [vmem:[#allocation2 + $0x550] sm:$0xff]
    %v333 = vld [vmem:[#allocation2 + $0x558] sm:$0xff]
    %v334 = vld [vmem:[#allocation2 + $0x560] sm:$0xff]
    %v335 = vld [vmem:[#allocation2 + $0x568] sm:$0xff]
    %v336 = vld [vmem:[#allocation2 + $0x570] sm:$0xff]
    %v337 = vld [vmem:[#allocation2 + $0x578] sm:$0xff]
    %v338 = vld [vmem:[#allocation2 + $0x580] sm:$0xff]
    %v339 = vld [vmem:[#allocation2 + $0x588] sm:$0xff]
    %v340 = vld [vmem:[#allocation2 + $0x590] sm:$0xff]
    %v341 = vld [vmem:[#allocation2 + $0x598] sm:$0xff]
    %v342 = vld [vmem:[#allocation2 + $0x5a0] sm:$0xff]
    %v343 = vld [vmem:[#allocation2 + $0x5a8] sm:$0xff]
    %v344 = vld [vmem:[#allocation2 + $0x5b0] sm:$0xff]
    %v345 = vld [vmem:[#allocation2 + $0x5b8] sm:$0xff]
    %v346 = vld [vmem:[#allocation2 + $0x5c0] sm:$0xff]
    %v347 = vld [vmem:[#allocation2 + $0x5c8] sm:$0xff]
    %v348 = vld [vmem:[#allocation2 + $0x5d0] sm:$0xff]
    %v349 = vld [vmem:[#allocation2 + $0x5d8] sm:$0xff]
    %v350 = vld [vmem:[#allocation2 + $0x5e0] sm:$0xff]
    %v351 = vld [vmem:[#allocation2 + $0x5e8] sm:$0xff]
    %v352 = vld [vmem:[#allocation2 + $0x5f0] sm:$0xff]
    %v353 = vld [vmem:[#allocation2 + $0x5f8] sm:$0xff]
    %v354 = vld [vmem:[#allocation2 + $0x600] sm:$0xff]
    %v355 = vld [vmem:[#allocation2 + $0x608] sm:$0xff]
    %v356 = vld [vmem:[#allocation2 + $0x610] sm:$0xff]
    %v357 = vld [vmem:[#allocation2 + $0x618] sm:$0xff]
    %v358 = vld [vmem:[#allocation2 + $0x620] sm:$0xff]
    %v359 = vld [vmem:[#allocation2 + $0x628] sm:$0xff]
    %v360 = vld [vmem:[#allocation2 + $0x630] sm:$0xff]
    %v361 = vld [vmem:[#allocation2 + $0x638] sm:$0xff]
    %v362 = vld [vmem:[#allocation2 + $0x640] sm:$0xff]
    %v363 = vld [vmem:[#allocation2 + $0x648] sm:$0xff]
    %v364 = vld [vmem:[#allocation2 + $0x650] sm:$0xff]
    %v365 = vld [vmem:[#allocation2 + $0x658] sm:$0xff]
    %v366 = vld [vmem:[#allocation2 + $0x660] sm:$0xff]
    %v367 = vld [vmem:[#allocation2 + $0x668] sm:$0xff]
    %v368 = vld [vmem:[#allocation2 + $0x670] sm:$0xff]
    %v369 = vld [vmem:[#allocation2 + $0x678] sm:$0xff]
    %v370 = vld [vmem:[#allocation2 + $0x680] sm:$0xff]
    %v371 = vld [vmem:[#allocation2 + $0x688] sm:$0xff]
    %v372 = vld [vmem:[#allocation2 + $0x690] sm:$0xff]
    %v373 = vld [vmem:[#allocation2 + $0x698] sm:$0xff]
    %v374 = vld [vmem:[#allocation2 + $0x6a0] sm:$0xff]
    %v375 = vld [vmem:[#allocation2 + $0x6a8] sm:$0xff]
    %v376 = vld [vmem:[#allocation2 + $0x6b0] sm:$0xff]
    %v377 = vld [vmem:[#allocation2 + $0x6b8] sm:$0xff]
    %v378 = vld [vmem:[#allocation2 + $0x6c0] sm:$0xff]
    %v379 = vld [vmem:[#allocation2 + $0x6c8] sm:$0xff]
    %v380 = vld [vmem:[#allocation2 + $0x6d0] sm:$0xff]
    %v381 = vld [vmem:[#allocation2 + $0x6d8] sm:$0xff]
    %v382 = vld [vmem:[#allocation2 + $0x6e0] sm:$0xff]
    %v383 = vld [vmem:[#allocation2 + $0x6e8] sm:$0xff]
    %v384 = vld [vmem:[#allocation2 + $0x6f0] sm:$0xff]
    %v385 = vld [vmem:[#allocation2 + $0x6f8] sm:$0xff]
    %v386 = vld [vmem:[#allocation2 + $0x700] sm:$0xff]
    %v387 = vld [vmem:[#allocation2 + $0x708] sm:$0xff]
    %v388 = vld [vmem:[#allocation2 + $0x710] sm:$0xff]
    %v389 = vld [vmem:[#allocation2 + $0x718] sm:$0xff]
    %v390 = vld [vmem:[#allocation2 + $0x720] sm:$0xff]
    %v391 = vld [vmem:[#allocation2 + $0x728] sm:$0xff]
    %v392 = vld [vmem:[#allocation2 + $0x730] sm:$0xff]
    %v393 = vld [vmem:[#allocation2 + $0x738] sm:$0xff]
    %v394 = vld [vmem:[#allocation2 + $0x740] sm:$0xff]
    %v395 = vld [vmem:[#allocation2 + $0x748] sm:$0xff]
    %v396 = vld [vmem:[#allocation2 + $0x750] sm:$0xff]
    %v397 = vld [vmem:[#allocation2 + $0x758] sm:$0xff]
    %v398 = vld [vmem:[#allocation2 + $0x760] sm:$0xff]
    %v399 = vld [vmem:[#allocation2 + $0x768] sm:$0xff]
    %v400 = vld [vmem:[#allocation2 + $0x770] sm:$0xff]
    %v401 = vld [vmem:[#allocation2 + $0x778] sm:$0xff]
    %v402 = vld [vmem:[#allocation2 + $0x780] sm:$0xff]
    %v403 = vld [vmem:[#allocation2 + $0x788] sm:$0xff]
    %v404 = vld [vmem:[#allocation2 + $0x790] sm:$0xff]
    %v405 = vld [vmem:[#allocation2 + $0x798] sm:$0xff]
    %v406 = vld [vmem:[#allocation2 + $0x7a0] sm:$0xff]
    %v407 = vld [vmem:[#allocation2 + $0x7a8] sm:$0xff]
    %v408 = vld [vmem:[#allocation2 + $0x7b0] sm:$0xff]
    %v409 = vld [vmem:[#allocation2 + $0x7b8] sm:$0xff]
    %v410 = vld [vmem:[#allocation2 + $0x7c0] sm:$0xff]
    %v411 = vld [vmem:[#allocation2 + $0x7c8] sm:$0xff]
    %v412 = vld [vmem:[#allocation2 + $0x7d0] sm:$0xff]
    %v413 = vld [vmem:[#allocation2 + $0x7d8] sm:$0xff]
    %v414 = vld [vmem:[#allocation2 + $0x7e0] sm:$0xff]
    %v415 = vld [vmem:[#allocation2 + $0x7e8] sm:$0xff]
    %v416 = vld [vmem:[#allocation2 + $0x7f0] sm:$0xff]
    %v417 = vld [vmem:[#allocation2 + $0x7f8] sm:$0xff]
    %v418 = vld [vmem:[#allocation2 + $0x800] sm:$0xff]
    %v419 = vld [vmem:[#allocation2 + $0x808] sm:$0xff]
    %v420 = vld [vmem:[#allocation2 + $0x810] sm:$0xff]
    %v421 = vld [vmem:[#allocation2 + $0x818] sm:$0xff]
    %v422 = vld [vmem:[#allocation2 + $0x820] sm:$0xff]
    %v423 = vld [vmem:[#allocation2 + $0x828] sm:$0xff]
    %v424 = vld [vmem:[#allocation2 + $0x830] sm:$0xff]
    %v425 = vld [vmem:[#allocation2 + $0x838] sm:$0xff]
    %v426 = vld [vmem:[#allocation2 + $0x840] sm:$0xff]
    %v427 = vld [vmem:[#allocation2 + $0x848] sm:$0xff]
    %v428 = vld [vmem:[#allocation2 + $0x850] sm:$0xff]
    %v429 = vld [vmem:[#allocation2 + $0x858] sm:$0xff]
    %v430 = vld [vmem:[#allocation2 + $0x860] sm:$0xff]
    %v431 = vld [vmem:[#allocation2 + $0x868] sm:$0xff]
    %v432 = vld [vmem:[#allocation2 + $0x870] sm:$0xff]
    %v433 = vld [vmem:[#allocation2 + $0x878] sm:$0xff]
    %v434 = vld [vmem:[#allocation2 + $0x880] sm:$0xff]
    %v435 = vld [vmem:[#allocation2 + $0x888] sm:$0xff]
    %v436 = vld [vmem:[#allocation2 + $0x890] sm:$0xff]
    %v437 = vld [vmem:[#allocation2 + $0x898] sm:$0xff]
    %v438 = vld [vmem:[#allocation2 + $0x8a0] sm:$0xff]
    %v439 = vld [vmem:[#allocation2 + $0x8a8] sm:$0xff]
    %v440 = vld [vmem:[#allocation2 + $0x8b0] sm:$0xff]
    %v441 = vld [vmem:[#allocation2 + $0x8b8] sm:$0xff]
    %v442 = vld [vmem:[#allocation2 + $0x8c0] sm:$0xff]
    %v443 = vld [vmem:[#allocation2 + $0x8c8] sm:$0xff]
    %v444 = vld [vmem:[#allocation2 + $0x8d0] sm:$0xff]
    %v445 = vld [vmem:[#allocation2 + $0x8d8] sm:$0xff]
    %v446 = vld [vmem:[#allocation2 + $0x8e0] sm:$0xff]
    %v447 = vld [vmem:[#allocation2 + $0x8e8] sm:$0xff]
    %v448 = vld [vmem:[#allocation2 + $0x8f0] sm:$0xff]
    %v449 = vld [vmem:[#allocation2 + $0x8f8] sm:$0xff]
    %v450 = vld [vmem:[#allocation2 + $0x900] sm:$0xff]
    %v451 = vld [vmem:[#allocation2 + $0x908] sm:$0xff]
    %v452 = vld [vmem:[#allocation2 + $0x910] sm:$0xff]
    %v453 = vld [vmem:[#allocation2 + $0x918] sm:$0xff]
    %v454 = vld [vmem:[#allocation2 + $0x920] sm:$0xff]
    %v455 = vld [vmem:[#allocation2 + $0x928] sm:$0xff]
    %v456 = vld [vmem:[#allocation2 + $0x930] sm:$0xff]
    %v457 = vld [vmem:[#allocation2 + $0x938] sm:$0xff]
    %v458 = vld [vmem:[#allocation2 + $0x940] sm:$0xff]
    %v459 = vld [vmem:[#allocation2 + $0x948] sm:$0xff]
    %v460 = vld [vmem:[#allocation2 + $0x950] sm:$0xff]
    %v461 = vld [vmem:[#allocation2 + $0x958] sm:$0xff]
    %v462 = vld [vmem:[#allocation2 + $0x960] sm:$0xff]
    %v463 = vld [vmem:[#allocation2 + $0x968] sm:$0xff]
    %v464 = vld [vmem:[#allocation2 + $0x970] sm:$0xff]
    %v465 = vld [vmem:[#allocation2 + $0x978] sm:$0xff]
    %v466 = vld [vmem:[#allocation2 + $0x980] sm:$0xff]
    %v467 = vld [vmem:[#allocation2 + $0x988] sm:$0xff]
    %v468 = vld [vmem:[#allocation2 + $0x990] sm:$0xff]
    %v469 = vld [vmem:[#allocation2 + $0x998] sm:$0xff]
    %v470 = vld [vmem:[#allocation2 + $0x9a0] sm:$0xff]
    %v471 = vld [vmem:[#allocation2 + $0x9a8] sm:$0xff]
    %v472 = vld [vmem:[#allocation2 + $0x9b0] sm:$0xff]
    %v473 = vld [vmem:[#allocation2 + $0x9b8] sm:$0xff]
    %v474 = vld [vmem:[#allocation2 + $0x9c0] sm:$0xff]
    %v475 = vld [vmem:[#allocation2 + $0x9c8] sm:$0xff]
    %v476 = vld [vmem:[#allocation2 + $0x9d0] sm:$0xff]
    %v477 = vld [vmem:[#allocation2 + $0x9d8] sm:$0xff]
    %v478 = vld [vmem:[#allocation2 + $0x9e0] sm:$0xff]
    %v479 = vld [vmem:[#allocation2 + $0x9e8] sm:$0xff]
    %v480 = vld [vmem:[#allocation2 + $0x9f0] sm:$0xff]
    %v481 = vld [vmem:[#allocation2 + $0x9f8] sm:$0xff]
    %v482 = vld [vmem:[#allocation2 + $0xa00] sm:$0xff]
    %v483 = vld [vmem:[#allocation2 + $0xa08] sm:$0xff]
    %v484 = vld [vmem:[#allocation2 + $0xa10] sm:$0xff]
    %v485 = vld [vmem:[#allocation2 + $0xa18] sm:$0xff]
    %v486 = vld [vmem:[#allocation2 + $0xa20] sm:$0xff]
    %v487 = vld [vmem:[#allocation2 + $0xa28] sm:$0xff]
    %v488 = vld [vmem:[#allocation2 + $0xa30] sm:$0xff]
    %v489 = vld [vmem:[#allocation2 + $0xa38] sm:$0xff]
    %v490 = vld [vmem:[#allocation2 + $0xa40] sm:$0xff]
    %v491 = vld [vmem:[#allocation2 + $0xa48] sm:$0xff]
    %v492 = vld [vmem:[#allocation2 + $0xa50] sm:$0xff]
    %v493 = vld [vmem:[#allocation2 + $0xa58] sm:$0xff]
    %v494 = vld [vmem:[#allocation2 + $0xa60] sm:$0xff]
    %v495 = vld [vmem:[#allocation2 + $0xa68] sm:$0xff]
    %v496 = vld [vmem:[#allocation2 + $0xa70] sm:$0xff]
    %v497 = vld [vmem:[#allocation2 + $0xa78] sm:$0xff]
    %v498 = vld [vmem:[#allocation2 + $0xa80] sm:$0xff]
    %v499 = vld [vmem:[#allocation2 + $0xa88] sm:$0xff]
    %v500 = vld [vmem:[#allocation2 + $0xa90] sm:$0xff]
    %v501 = vld [vmem:[#allocation2 + $0xa98] sm:$0xff]
    %v502 = vld [vmem:[#allocation2 + $0xaa0] sm:$0xff]
    %v503 = vld [vmem:[#allocation2 + $0xaa8] sm:$0xff]
    %v504 = vld [vmem:[#allocation2 + $0xab0] sm:$0xff]
    %v505 = vld [vmem:[#allocation2 + $0xab8] sm:$0xff]
    %v506 = vld [vmem:[#allocation2 + $0xac0] sm:$0xff]
    %v507 = vld [vmem:[#allocation2 + $0xac8] sm:$0xff]
    %v508 = vld [vmem:[#allocation2 + $0xad0] sm:$0xff]
    %v509 = vld [vmem:[#allocation2 + $0xad8] sm:$0xff]
    %v510 = vld [vmem:[#allocation2 + $0xae0] sm:$0xff]
    %v511 = vld [vmem:[#allocation2 + $0xae8] sm:$0xff]
    %v512 = vld [vmem:[#allocation2 + $0xaf0] sm:$0xff]
    %v513 = vld [vmem:[#allocation2 + $0xaf8] sm:$0xff]
    %v514 = vld [vmem:[#allocation2 + $0xb00] sm:$0xff]
    %v515 = vld [vmem:[#allocation2 + $0xb08] sm:$0xff]
    %v516 = vld [vmem:[#allocation2 + $0xb10] sm:$0xff]
    %v517 = vld [vmem:[#allocation2 + $0xb18] sm:$0xff]
    %v518 = vld [vmem:[#allocation2 + $0xb20] sm:$0xff]
    %v519 = vld [vmem:[#allocation2 + $0xb28] sm:$0xff]
    %v520 = vld [vmem:[#allocation2 + $0xb30] sm:$0xff]
    %v521 = vld [vmem:[#allocation2 + $0xb38] sm:$0xff]
    %v522 = vld [vmem:[#allocation2 + $0xb40] sm:$0xff]
    %v523 = vld [vmem:[#allocation2 + $0xb48] sm:$0xff]
    %v524 = vld [vmem:[#allocation2 + $0xb50] sm:$0xff]
    %v525 = vld [vmem:[#allocation2 + $0xb58] sm:$0xff]
    %v526 = vld [vmem:[#allocation2 + $0xb60] sm:$0xff]
    %v527 = vld [vmem:[#allocation2 + $0xb68] sm:$0xff]
    %v528 = vld [vmem:[#allocation2 + $0xb70] sm:$0xff]
    %v529 = vld [vmem:[#allocation2 + $0xb78] sm:$0xff]
    %v530 = vld [vmem:[#allocation2 + $0xb80] sm:$0xff]
    %v531 = vld [vmem:[#allocation2 + $0xb88] sm:$0xff]
    %v532 = vld [vmem:[#allocation2 + $0xb90] sm:$0xff]
    %v533 = vld [vmem:[#allocation2 + $0xb98] sm:$0xff]
    %v534 = vld [vmem:[#allocation2 + $0xba0] sm:$0xff]
    %v535 = vld [vmem:[#allocation2 + $0xba8] sm:$0xff]
    %v536 = vld [vmem:[#allocation2 + $0xbb0] sm:$0xff]
    %v537 = vld [vmem:[#allocation2 + $0xbb8] sm:$0xff]
    %v538 = vld [vmem:[#allocation2 + $0xbc0] sm:$0xff]
    %v539 = vld [vmem:[#allocation2 + $0xbc8] sm:$0xff]
    %v540 = vld [vmem:[#allocation2 + $0xbd0] sm:$0xff]
    %v541 = vld [vmem:[#allocation2 + $0xbd8] sm:$0xff]
    %v542 = vld [vmem:[#allocation2 + $0xbe0] sm:$0xff]
    %v543 = vld [vmem:[#allocation2 + $0xbe8] sm:$0xff]
    %v544 = vld [vmem:[#allocation2 + $0xbf0] sm:$0xff]
    %v545 = vld [vmem:[#allocation2 + $0xbf8] sm:$0xff]
    %v546 = vld [vmem:[#allocation4] sm:$0x3]
    %v548 = vperm.slane %v546, 0
    %v549 = vperm.slane %v546, 1
    %v936 = vunpack.c.l.b16 %v162
    %v937 = vunpack.c.h.b16 %v162
    %v938 = vunpack.c.l.b16 %v163
    %v939 = vunpack.c.h.b16 %v163
    %v940 = vunpack.c.l.b16 %v164
    %v941 = vunpack.c.h.b16 %v164
    %v942 = vunpack.c.l.b16 %v165
    %v943 = vunpack.c.h.b16 %v165
    %v944 = vunpack.c.l.b16 %v166
    %v945 = vunpack.c.h.b16 %v166
    %v946 = vunpack.c.l.b16 %v167
    %v947 = vunpack.c.h.b16 %v167
    %v948 = vunpack.c.l.b16 %v168
    %v949 = vunpack.c.h.b16 %v168
    %v950 = vunpack.c.l.b16 %v169
    %v951 = vunpack.c.h.b16 %v169
    %v952 = vunpack.c.l.b16 %v170
    %v953 = vunpack.c.h.b16 %v170
    %v954 = vunpack.c.l.b16 %v171
    %v955 = vunpack.c.h.b16 %v171
    %v956 = vunpack.c.l.b16 %v172
    %v957 = vunpack.c.h.b16 %v172
    %v958 = vunpack.c.l.b16 %v173
    %v959 = vunpack.c.h.b16 %v173
    %v960 = vunpack.c.l.b16 %v174
    %v961 = vunpack.c.h.b16 %v174
    %v962 = vunpack.c.l.b16 %v175
    %v963 = vunpack.c.h.b16 %v175
    %v964 = vunpack.c.l.b16 %v176
    %v965 = vunpack.c.h.b16 %v176
    %v966 = vunpack.c.l.b16 %v177
    %v967 = vunpack.c.h.b16 %v177
    %v968 = vunpack.c.l.b16 %v178
    %v969 = vunpack.c.h.b16 %v178
    %v970 = vunpack.c.l.b16 %v179
    %v971 = vunpack.c.h.b16 %v179
    %v972 = vunpack.c.l.b16 %v180
    %v973 = vunpack.c.h.b16 %v180
    %v974 = vunpack.c.l.b16 %v181
    %v975 = vunpack.c.h.b16 %v181
    %v976 = vunpack.c.l.b16 %v182
    %v977 = vunpack.c.h.b16 %v182
    %v978 = vunpack.c.l.b16 %v183
    %v979 = vunpack.c.h.b16 %v183
    %v980 = vunpack.c.l.b16 %v184
    %v981 = vunpack.c.h.b16 %v184
    %v982 = vunpack.c.l.b16 %v185
    %v983 = vunpack.c.h.b16 %v185
    %v984 = vunpack.c.l.b16 %v186
    %v985 = vunpack.c.h.b16 %v186
    %v986 = vunpack.c.l.b16 %v187
    %v987 = vunpack.c.h.b16 %v187
    %v988 = vunpack.c.l.b16 %v188
    %v989 = vunpack.c.h.b16 %v188
    %v990 = vunpack.c.l.b16 %v189
    %v991 = vunpack.c.h.b16 %v189
    %v992 = vunpack.c.l.b16 %v190
    %v993 = vunpack.c.h.b16 %v190
    %v994 = vunpack.c.l.b16 %v191
    %v995 = vunpack.c.h.b16 %v191
    %v996 = vunpack.c.l.b16 %v192
    %v997 = vunpack.c.h.b16 %v192
    %v998 = vunpack.c.l.b16 %v193
    %v999 = vunpack.c.h.b16 %v193
    %v1000 = vunpack.c.l.b16 %v194
    %v1001 = vunpack.c.h.b16 %v194
    %v1002 = vunpack.c.l.b16 %v195
    %v1003 = vunpack.c.h.b16 %v195
    %v1004 = vunpack.c.l.b16 %v196
    %v1005 = vunpack.c.h.b16 %v196
    %v1006 = vunpack.c.l.b16 %v197
    %v1007 = vunpack.c.h.b16 %v197
    %v1008 = vunpack.c.l.b16 %v198
    %v1009 = vunpack.c.h.b16 %v198
    %v1010 = vunpack.c.l.b16 %v199
    %v1011 = vunpack.c.h.b16 %v199
    %v1012 = vunpack.c.l.b16 %v200
    %v1013 = vunpack.c.h.b16 %v200
    %v1014 = vunpack.c.l.b16 %v201
    %v1015 = vunpack.c.h.b16 %v201
    %v1016 = vunpack.c.l.b16 %v202
    %v1017 = vunpack.c.h.b16 %v202
    %v1018 = vunpack.c.l.b16 %v203
    %v1019 = vunpack.c.h.b16 %v203
    %v1020 = vunpack.c.l.b16 %v204
    %v1021 = vunpack.c.h.b16 %v204
    %v1022 = vunpack.c.l.b16 %v205
    %v1023 = vunpack.c.h.b16 %v205
    %v1024 = vunpack.c.l.b16 %v206
    %v1025 = vunpack.c.h.b16 %v206
    %v1026 = vunpack.c.l.b16 %v207
    %v1027 = vunpack.c.h.b16 %v207
    %v1028 = vunpack.c.l.b16 %v208
    %v1029 = vunpack.c.h.b16 %v208
    %v1030 = vunpack.c.l.b16 %v209
    %v1031 = vunpack.c.h.b16 %v209
    %v1032 = vunpack.c.l.b16 %v210
    %v1033 = vunpack.c.h.b16 %v210
    %v1034 = vunpack.c.l.b16 %v211
    %v1035 = vunpack.c.h.b16 %v211
    %v1036 = vunpack.c.l.b16 %v212
    %v1037 = vunpack.c.h.b16 %v212
    %v1038 = vunpack.c.l.b16 %v213
    %v1039 = vunpack.c.h.b16 %v213
    %v1040 = vunpack.c.l.b16 %v214
    %v1041 = vunpack.c.h.b16 %v214
    %v1042 = vunpack.c.l.b16 %v215
    %v1043 = vunpack.c.h.b16 %v215
    %v1044 = vunpack.c.l.b16 %v216
    %v1045 = vunpack.c.h.b16 %v216
    %v1046 = vunpack.c.l.b16 %v217
    %v1047 = vunpack.c.h.b16 %v217
    %v1048 = vunpack.c.l.b16 %v218
    %v1049 = vunpack.c.h.b16 %v218
    %v1050 = vunpack.c.l.b16 %v219
    %v1051 = vunpack.c.h.b16 %v219
    %v1052 = vunpack.c.l.b16 %v220
    %v1053 = vunpack.c.h.b16 %v220
    %v1054 = vunpack.c.l.b16 %v221
    %v1055 = vunpack.c.h.b16 %v221
    %v1056 = vunpack.c.l.b16 %v222
    %v1057 = vunpack.c.h.b16 %v222
    %v1058 = vunpack.c.l.b16 %v223
    %v1059 = vunpack.c.h.b16 %v223
    %v1060 = vunpack.c.l.b16 %v224
    %v1061 = vunpack.c.h.b16 %v224
    %v1062 = vunpack.c.l.b16 %v225
    %v1063 = vunpack.c.h.b16 %v225
    %v1064 = vunpack.c.l.b16 %v226
    %v1065 = vunpack.c.h.b16 %v226
    %v1066 = vunpack.c.l.b16 %v227
    %v1067 = vunpack.c.h.b16 %v227
    %v1068 = vunpack.c.l.b16 %v228
    %v1069 = vunpack.c.h.b16 %v228
    %v1070 = vunpack.c.l.b16 %v229
    %v1071 = vunpack.c.h.b16 %v229
    %v1072 = vunpack.c.l.b16 %v230
    %v1073 = vunpack.c.h.b16 %v230
    %v1074 = vunpack.c.l.b16 %v231
    %v1075 = vunpack.c.h.b16 %v231
    %v1076 = vunpack.c.l.b16 %v232
    %v1077 = vunpack.c.h.b16 %v232
    %v1078 = vunpack.c.l.b16 %v233
    %v1079 = vunpack.c.h.b16 %v233
    %v1080 = vunpack.c.l.b16 %v234
    %v1081 = vunpack.c.h.b16 %v234
    %v1082 = vunpack.c.l.b16 %v235
    %v1083 = vunpack.c.h.b16 %v235
    %v1084 = vunpack.c.l.b16 %v236
    %v1085 = vunpack.c.h.b16 %v236
    %v1086 = vunpack.c.l.b16 %v237
    %v1087 = vunpack.c.h.b16 %v237
    %v1088 = vunpack.c.l.b16 %v238
    %v1089 = vunpack.c.h.b16 %v238
    %v1090 = vunpack.c.l.b16 %v239
    %v1091 = vunpack.c.h.b16 %v239
    %v1092 = vunpack.c.l.b16 %v240
    %v1093 = vunpack.c.h.b16 %v240
    %v1094 = vunpack.c.l.b16 %v241
    %v1095 = vunpack.c.h.b16 %v241
    %v1096 = vunpack.c.l.b16 %v242
    %v1097 = vunpack.c.h.b16 %v242
    %v1098 = vunpack.c.l.b16 %v243
    %v1099 = vunpack.c.h.b16 %v243
    %v1100 = vunpack.c.l.b16 %v244
    %v1101 = vunpack.c.h.b16 %v244
    %v1102 = vunpack.c.l.b16 %v245
    %v1103 = vunpack.c.h.b16 %v245
    %v1104 = vunpack.c.l.b16 %v246
    %v1105 = vunpack.c.h.b16 %v246
    %v1106 = vunpack.c.l.b16 %v247
    %v1107 = vunpack.c.h.b16 %v247
    %v1108 = vunpack.c.l.b16 %v248
    %v1109 = vunpack.c.h.b16 %v248
    %v1110 = vunpack.c.l.b16 %v249
    %v1111 = vunpack.c.h.b16 %v249
    %v1112 = vunpack.c.l.b16 %v250
    %v1113 = vunpack.c.h.b16 %v250
    %v1114 = vunpack.c.l.b16 %v251
    %v1115 = vunpack.c.h.b16 %v251
    %v1116 = vunpack.c.l.b16 %v252
    %v1117 = vunpack.c.h.b16 %v252
    %v1118 = vunpack.c.l.b16 %v253
    %v1119 = vunpack.c.h.b16 %v253
    %v1120 = vunpack.c.l.b16 %v254
    %v1121 = vunpack.c.h.b16 %v254
    %v1122 = vunpack.c.l.b16 %v255
    %v1123 = vunpack.c.h.b16 %v255
    %v1124 = vunpack.c.l.b16 %v256
    %v1125 = vunpack.c.h.b16 %v256
    %v1126 = vunpack.c.l.b16 %v257
    %v1127 = vunpack.c.h.b16 %v257
    %v1128 = vunpack.c.l.b16 %v258
    %v1129 = vunpack.c.h.b16 %v258
    %v1130 = vunpack.c.l.b16 %v259
    %v1131 = vunpack.c.h.b16 %v259
    %v1132 = vunpack.c.l.b16 %v260
    %v1133 = vunpack.c.h.b16 %v260
    %v1134 = vunpack.c.l.b16 %v261
    %v1135 = vunpack.c.h.b16 %v261
    %v1136 = vunpack.c.l.b16 %v262
    %v1137 = vunpack.c.h.b16 %v262
    %v1138 = vunpack.c.l.b16 %v263
    %v1139 = vunpack.c.h.b16 %v263
    %v1140 = vunpack.c.l.b16 %v264
    %v1141 = vunpack.c.h.b16 %v264
    %v1142 = vunpack.c.l.b16 %v265
    %v1143 = vunpack.c.h.b16 %v265
    %v1144 = vunpack.c.l.b16 %v266
    %v1145 = vunpack.c.h.b16 %v266
    %v1146 = vunpack.c.l.b16 %v267
    %v1147 = vunpack.c.h.b16 %v267
    %v1148 = vunpack.c.l.b16 %v268
    %v1149 = vunpack.c.h.b16 %v268
    %v1150 = vunpack.c.l.b16 %v269
    %v1151 = vunpack.c.h.b16 %v269
    %v1152 = vunpack.c.l.b16 %v270
    %v1153 = vunpack.c.h.b16 %v270
    %v1154 = vunpack.c.l.b16 %v271
    %v1155 = vunpack.c.h.b16 %v271
    %v1156 = vunpack.c.l.b16 %v272
    %v1157 = vunpack.c.h.b16 %v272
    %v1158 = vunpack.c.l.b16 %v273
    %v1159 = vunpack.c.h.b16 %v273
    %v1160 = vunpack.c.l.b16 %v274
    %v1161 = vunpack.c.h.b16 %v274
    %v1162 = vunpack.c.l.b16 %v275
    %v1163 = vunpack.c.h.b16 %v275
    %v1164 = vunpack.c.l.b16 %v276
    %v1165 = vunpack.c.h.b16 %v276
    %v1166 = vunpack.c.l.b16 %v277
    %v1167 = vunpack.c.h.b16 %v277
    %v1168 = vunpack.c.l.b16 %v278
    %v1169 = vunpack.c.h.b16 %v278
    %v1170 = vunpack.c.l.b16 %v279
    %v1171 = vunpack.c.h.b16 %v279
    %v1172 = vunpack.c.l.b16 %v280
    %v1173 = vunpack.c.h.b16 %v280
    %v1174 = vunpack.c.l.b16 %v281
    %v1175 = vunpack.c.h.b16 %v281
    %v1176 = vunpack.c.l.b16 %v282
    %v1177 = vunpack.c.h.b16 %v282
    %v1178 = vunpack.c.l.b16 %v283
    %v1179 = vunpack.c.h.b16 %v283
    %v1180 = vunpack.c.l.b16 %v284
    %v1181 = vunpack.c.h.b16 %v284
    %v1182 = vunpack.c.l.b16 %v285
    %v1183 = vunpack.c.h.b16 %v285
    %v1184 = vunpack.c.l.b16 %v286
    %v1185 = vunpack.c.h.b16 %v286
    %v1186 = vunpack.c.l.b16 %v287
    %v1187 = vunpack.c.h.b16 %v287
    %v1188 = vunpack.c.l.b16 %v288
    %v1189 = vunpack.c.h.b16 %v288
    %v1190 = vunpack.c.l.b16 %v289
    %v1191 = vunpack.c.h.b16 %v289
    %v1192 = vunpack.c.l.b16 %v290
    %v1193 = vunpack.c.h.b16 %v290
    %v1194 = vunpack.c.l.b16 %v291
    %v1195 = vunpack.c.h.b16 %v291
    %v1196 = vunpack.c.l.b16 %v292
    %v1197 = vunpack.c.h.b16 %v292
    %v1198 = vunpack.c.l.b16 %v293
    %v1199 = vunpack.c.h.b16 %v293
    %v1200 = vunpack.c.l.b16 %v294
    %v1201 = vunpack.c.h.b16 %v294
    %v1202 = vunpack.c.l.b16 %v295
    %v1203 = vunpack.c.h.b16 %v295
    %v1204 = vunpack.c.l.b16 %v296
    %v1205 = vunpack.c.h.b16 %v296
    %v1206 = vunpack.c.l.b16 %v297
    %v1207 = vunpack.c.h.b16 %v297
    %v1208 = vunpack.c.l.b16 %v298
    %v1209 = vunpack.c.h.b16 %v298
    %v1210 = vunpack.c.l.b16 %v299
    %v1211 = vunpack.c.h.b16 %v299
    %v1212 = vunpack.c.l.b16 %v300
    %v1213 = vunpack.c.h.b16 %v300
    %v1214 = vunpack.c.l.b16 %v301
    %v1215 = vunpack.c.h.b16 %v301
    %v1216 = vunpack.c.l.b16 %v302
    %v1217 = vunpack.c.h.b16 %v302
    %v1218 = vunpack.c.l.b16 %v303
    %v1219 = vunpack.c.h.b16 %v303
    %v1220 = vunpack.c.l.b16 %v304
    %v1221 = vunpack.c.h.b16 %v304
    %v1222 = vunpack.c.l.b16 %v305
    %v1223 = vunpack.c.h.b16 %v305
    %v1224 = vunpack.c.l.b16 %v306
    %v1225 = vunpack.c.h.b16 %v306
    %v1226 = vunpack.c.l.b16 %v307
    %v1227 = vunpack.c.h.b16 %v307
    %v1228 = vunpack.c.l.b16 %v308
    %v1229 = vunpack.c.h.b16 %v308
    %v1230 = vunpack.c.l.b16 %v309
    %v1231 = vunpack.c.h.b16 %v309
    %v1232 = vunpack.c.l.b16 %v310
    %v1233 = vunpack.c.h.b16 %v310
    %v1234 = vunpack.c.l.b16 %v311
    %v1235 = vunpack.c.h.b16 %v311
    %v1236 = vunpack.c.l.b16 %v312
    %v1237 = vunpack.c.h.b16 %v312
    %v1238 = vunpack.c.l.b16 %v313
    %v1239 = vunpack.c.h.b16 %v313
    %v1240 = vunpack.c.l.b16 %v314
    %v1241 = vunpack.c.h.b16 %v314
    %v1242 = vunpack.c.l.b16 %v315
    %v1243 = vunpack.c.h.b16 %v315
    %v1244 = vunpack.c.l.b16 %v316
    %v1245 = vunpack.c.h.b16 %v316
    %v1246 = vunpack.c.l.b16 %v317
    %v1247 = vunpack.c.h.b16 %v317
    %v1248 = vunpack.c.l.b16 %v318
    %v1249 = vunpack.c.h.b16 %v318
    %v1250 = vunpack.c.l.b16 %v319
    %v1251 = vunpack.c.h.b16 %v319
    %v1252 = vunpack.c.l.b16 %v320
    %v1253 = vunpack.c.h.b16 %v320
    %v1254 = vunpack.c.l.b16 %v321
    %v1255 = vunpack.c.h.b16 %v321
    %v1256 = vunpack.c.l.b16 %v322
    %v1257 = vunpack.c.h.b16 %v322
    %v1258 = vunpack.c.l.b16 %v323
    %v1259 = vunpack.c.h.b16 %v323
    %v1260 = vunpack.c.l.b16 %v324
    %v1261 = vunpack.c.h.b16 %v324
    %v1262 = vunpack.c.l.b16 %v325
    %v1263 = vunpack.c.h.b16 %v325
    %v1264 = vunpack.c.l.b16 %v326
    %v1265 = vunpack.c.h.b16 %v326
    %v1266 = vunpack.c.l.b16 %v327
    %v1267 = vunpack.c.h.b16 %v327
    %v1268 = vunpack.c.l.b16 %v328
    %v1269 = vunpack.c.h.b16 %v328
    %v1270 = vunpack.c.l.b16 %v329
    %v1271 = vunpack.c.h.b16 %v329
    %v1272 = vunpack.c.l.b16 %v330
    %v1273 = vunpack.c.h.b16 %v330
    %v1274 = vunpack.c.l.b16 %v331
    %v1275 = vunpack.c.h.b16 %v331
    %v1276 = vunpack.c.l.b16 %v332
    %v1277 = vunpack.c.h.b16 %v332
    %v1278 = vunpack.c.l.b16 %v333
    %v1279 = vunpack.c.h.b16 %v333
    %v1280 = vunpack.c.l.b16 %v334
    %v1281 = vunpack.c.h.b16 %v334
    %v1282 = vunpack.c.l.b16 %v335
    %v1283 = vunpack.c.h.b16 %v335
    %v1284 = vunpack.c.l.b16 %v336
    %v1285 = vunpack.c.h.b16 %v336
    %v1286 = vunpack.c.l.b16 %v337
    %v1287 = vunpack.c.h.b16 %v337
    %v1288 = vunpack.c.l.b16 %v338
    %v1289 = vunpack.c.h.b16 %v338
    %v1290 = vunpack.c.l.b16 %v339
    %v1291 = vunpack.c.h.b16 %v339
    %v1292 = vunpack.c.l.b16 %v340
    %v1293 = vunpack.c.h.b16 %v340
    %v1294 = vunpack.c.l.b16 %v341
    %v1295 = vunpack.c.h.b16 %v341
    %v1296 = vunpack.c.l.b16 %v342
    %v1297 = vunpack.c.h.b16 %v342
    %v1298 = vunpack.c.l.b16 %v343
    %v1299 = vunpack.c.h.b16 %v343
    %v1300 = vunpack.c.l.b16 %v344
    %v1301 = vunpack.c.h.b16 %v344
    %v1302 = vunpack.c.l.b16 %v345
    %v1303 = vunpack.c.h.b16 %v345
    %v1304 = vunpack.c.l.b16 %v346
    %v1305 = vunpack.c.h.b16 %v346
    %v1306 = vunpack.c.l.b16 %v347
    %v1307 = vunpack.c.h.b16 %v347
    %v1308 = vunpack.c.l.b16 %v348
    %v1309 = vunpack.c.h.b16 %v348
    %v1310 = vunpack.c.l.b16 %v349
    %v1311 = vunpack.c.h.b16 %v349
    %v1312 = vunpack.c.l.b16 %v350
    %v1313 = vunpack.c.h.b16 %v350
    %v1314 = vunpack.c.l.b16 %v351
    %v1315 = vunpack.c.h.b16 %v351
    %v1316 = vunpack.c.l.b16 %v352
    %v1317 = vunpack.c.h.b16 %v352
    %v1318 = vunpack.c.l.b16 %v353
    %v1319 = vunpack.c.h.b16 %v353
    %v1320 = vunpack.c.l.b16 %v354
    %v1321 = vunpack.c.h.b16 %v354
    %v1322 = vunpack.c.l.b16 %v355
    %v1323 = vunpack.c.h.b16 %v355
    %v1324 = vunpack.c.l.b16 %v356
    %v1325 = vunpack.c.h.b16 %v356
    %v1326 = vunpack.c.l.b16 %v357
    %v1327 = vunpack.c.h.b16 %v357
    %v1328 = vunpack.c.l.b16 %v358
    %v1329 = vunpack.c.h.b16 %v358
    %v1330 = vunpack.c.l.b16 %v359
    %v1331 = vunpack.c.h.b16 %v359
    %v1332 = vunpack.c.l.b16 %v360
    %v1333 = vunpack.c.h.b16 %v360
    %v1334 = vunpack.c.l.b16 %v361
    %v1335 = vunpack.c.h.b16 %v361
    %v1336 = vunpack.c.l.b16 %v362
    %v1337 = vunpack.c.h.b16 %v362
    %v1338 = vunpack.c.l.b16 %v363
    %v1339 = vunpack.c.h.b16 %v363
    %v1340 = vunpack.c.l.b16 %v364
    %v1341 = vunpack.c.h.b16 %v364
    %v1342 = vunpack.c.l.b16 %v365
    %v1343 = vunpack.c.h.b16 %v365
    %v1344 = vunpack.c.l.b16 %v366
    %v1345 = vunpack.c.h.b16 %v366
    %v1346 = vunpack.c.l.b16 %v367
    %v1347 = vunpack.c.h.b16 %v367
    %v1348 = vunpack.c.l.b16 %v368
    %v1349 = vunpack.c.h.b16 %v368
    %v1350 = vunpack.c.l.b16 %v369
    %v1351 = vunpack.c.h.b16 %v369
    %v1352 = vunpack.c.l.b16 %v370
    %v1353 = vunpack.c.h.b16 %v370
    %v1354 = vunpack.c.l.b16 %v371
    %v1355 = vunpack.c.h.b16 %v371
    %v1356 = vunpack.c.l.b16 %v372
    %v1357 = vunpack.c.h.b16 %v372
    %v1358 = vunpack.c.l.b16 %v373
    %v1359 = vunpack.c.h.b16 %v373
    %v1360 = vunpack.c.l.b16 %v374
    %v1361 = vunpack.c.h.b16 %v374
    %v1362 = vunpack.c.l.b16 %v375
    %v1363 = vunpack.c.h.b16 %v375
    %v1364 = vunpack.c.l.b16 %v376
    %v1365 = vunpack.c.h.b16 %v376
    %v1366 = vunpack.c.l.b16 %v377
    %v1367 = vunpack.c.h.b16 %v377
    %v1368 = vunpack.c.l.b16 %v378
    %v1369 = vunpack.c.h.b16 %v378
    %v1370 = vunpack.c.l.b16 %v379
    %v1371 = vunpack.c.h.b16 %v379
    %v1372 = vunpack.c.l.b16 %v380
    %v1373 = vunpack.c.h.b16 %v380
    %v1374 = vunpack.c.l.b16 %v381
    %v1375 = vunpack.c.h.b16 %v381
    %v1376 = vunpack.c.l.b16 %v382
    %v1377 = vunpack.c.h.b16 %v382
    %v1378 = vunpack.c.l.b16 %v383
    %v1379 = vunpack.c.h.b16 %v383
    %v1380 = vunpack.c.l.b16 %v384
    %v1381 = vunpack.c.h.b16 %v384
    %v1382 = vunpack.c.l.b16 %v385
    %v1383 = vunpack.c.h.b16 %v385
    %v1384 = vunpack.c.l.b16 %v386
    %v1385 = vunpack.c.h.b16 %v386
    %v1386 = vunpack.c.l.b16 %v387
    %v1387 = vunpack.c.h.b16 %v387
    %v1388 = vunpack.c.l.b16 %v388
    %v1389 = vunpack.c.h.b16 %v388
    %v1390 = vunpack.c.l.b16 %v389
    %v1391 = vunpack.c.h.b16 %v389
    %v1392 = vunpack.c.l.b16 %v390
    %v1393 = vunpack.c.h.b16 %v390
    %v1394 = vunpack.c.l.b16 %v391
    %v1395 = vunpack.c.h.b16 %v391
    %v1396 = vunpack.c.l.b16 %v392
    %v1397 = vunpack.c.h.b16 %v392
    %v1398 = vunpack.c.l.b16 %v393
    %v1399 = vunpack.c.h.b16 %v393
    %v1400 = vunpack.c.l.b16 %v394
    %v1401 = vunpack.c.h.b16 %v394
    %v1402 = vunpack.c.l.b16 %v395
    %v1403 = vunpack.c.h.b16 %v395
    %v1404 = vunpack.c.l.b16 %v396
    %v1405 = vunpack.c.h.b16 %v396
    %v1406 = vunpack.c.l.b16 %v397
    %v1407 = vunpack.c.h.b16 %v397
    %v1408 = vunpack.c.l.b16 %v398
    %v1409 = vunpack.c.h.b16 %v398
    %v1410 = vunpack.c.l.b16 %v399
    %v1411 = vunpack.c.h.b16 %v399
    %v1412 = vunpack.c.l.b16 %v400
    %v1413 = vunpack.c.h.b16 %v400
    %v1414 = vunpack.c.l.b16 %v401
    %v1415 = vunpack.c.h.b16 %v401
    %v1416 = vunpack.c.l.b16 %v402
    %v1417 = vunpack.c.h.b16 %v402
    %v1418 = vunpack.c.l.b16 %v403
    %v1419 = vunpack.c.h.b16 %v403
    %v1420 = vunpack.c.l.b16 %v404
    %v1421 = vunpack.c.h.b16 %v404
    %v1422 = vunpack.c.l.b16 %v405
    %v1423 = vunpack.c.h.b16 %v405
    %v1424 = vunpack.c.l.b16 %v406
    %v1425 = vunpack.c.h.b16 %v406
    %v1426 = vunpack.c.l.b16 %v407
    %v1427 = vunpack.c.h.b16 %v407
    %v1428 = vunpack.c.l.b16 %v408
    %v1429 = vunpack.c.h.b16 %v408
    %v1430 = vunpack.c.l.b16 %v409
    %v1431 = vunpack.c.h.b16 %v409
    %v1432 = vunpack.c.l.b16 %v410
    %v1433 = vunpack.c.h.b16 %v410
    %v1434 = vunpack.c.l.b16 %v411
    %v1435 = vunpack.c.h.b16 %v411
    %v1436 = vunpack.c.l.b16 %v412
    %v1437 = vunpack.c.h.b16 %v412
    %v1438 = vunpack.c.l.b16 %v413
    %v1439 = vunpack.c.h.b16 %v413
    %v1440 = vunpack.c.l.b16 %v414
    %v1441 = vunpack.c.h.b16 %v414
    %v1442 = vunpack.c.l.b16 %v415
    %v1443 = vunpack.c.h.b16 %v415
    %v1444 = vunpack.c.l.b16 %v416
    %v1445 = vunpack.c.h.b16 %v416
    %v1446 = vunpack.c.l.b16 %v417
    %v1447 = vunpack.c.h.b16 %v417
    %v1448 = vunpack.c.l.b16 %v418
    %v1449 = vunpack.c.h.b16 %v418
    %v1450 = vunpack.c.l.b16 %v419
    %v1451 = vunpack.c.h.b16 %v419
    %v1452 = vunpack.c.l.b16 %v420
    %v1453 = vunpack.c.h.b16 %v420
    %v1454 = vunpack.c.l.b16 %v421
    %v1455 = vunpack.c.h.b16 %v421
    %v1456 = vunpack.c.l.b16 %v422
    %v1457 = vunpack.c.h.b16 %v422
    %v1458 = vunpack.c.l.b16 %v423
    %v1459 = vunpack.c.h.b16 %v423
    %v1460 = vunpack.c.l.b16 %v424
    %v1461 = vunpack.c.h.b16 %v424
    %v1462 = vunpack.c.l.b16 %v425
    %v1463 = vunpack.c.h.b16 %v425
    %v1464 = vunpack.c.l.b16 %v426
    %v1465 = vunpack.c.h.b16 %v426
    %v1466 = vunpack.c.l.b16 %v427
    %v1467 = vunpack.c.h.b16 %v427
    %v1468 = vunpack.c.l.b16 %v428
    %v1469 = vunpack.c.h.b16 %v428
    %v1470 = vunpack.c.l.b16 %v429
    %v1471 = vunpack.c.h.b16 %v429
    %v1472 = vunpack.c.l.b16 %v430
    %v1473 = vunpack.c.h.b16 %v430
    %v1474 = vunpack.c.l.b16 %v431
    %v1475 = vunpack.c.h.b16 %v431
    %v1476 = vunpack.c.l.b16 %v432
    %v1477 = vunpack.c.h.b16 %v432
    %v1478 = vunpack.c.l.b16 %v433
    %v1479 = vunpack.c.h.b16 %v433
    %v1480 = vunpack.c.l.b16 %v434
    %v1481 = vunpack.c.h.b16 %v434
    %v1482 = vunpack.c.l.b16 %v435
    %v1483 = vunpack.c.h.b16 %v435
    %v1484 = vunpack.c.l.b16 %v436
    %v1485 = vunpack.c.h.b16 %v436
    %v1486 = vunpack.c.l.b16 %v437
    %v1487 = vunpack.c.h.b16 %v437
    %v1488 = vunpack.c.l.b16 %v438
    %v1489 = vunpack.c.h.b16 %v438
    %v1490 = vunpack.c.l.b16 %v439
    %v1491 = vunpack.c.h.b16 %v439
    %v1492 = vunpack.c.l.b16 %v440
    %v1493 = vunpack.c.h.b16 %v440
    %v1494 = vunpack.c.l.b16 %v441
    %v1495 = vunpack.c.h.b16 %v441
    %v1496 = vunpack.c.l.b16 %v442
    %v1497 = vunpack.c.h.b16 %v442
    %v1498 = vunpack.c.l.b16 %v443
    %v1499 = vunpack.c.h.b16 %v443
    %v1500 = vunpack.c.l.b16 %v444
    %v1501 = vunpack.c.h.b16 %v444
    %v1502 = vunpack.c.l.b16 %v445
    %v1503 = vunpack.c.h.b16 %v445
    %v1504 = vunpack.c.l.b16 %v446
    %v1505 = vunpack.c.h.b16 %v446
    %v1506 = vunpack.c.l.b16 %v447
    %v1507 = vunpack.c.h.b16 %v447
    %v1508 = vunpack.c.l.b16 %v448
    %v1509 = vunpack.c.h.b16 %v448
    %v1510 = vunpack.c.l.b16 %v449
    %v1511 = vunpack.c.h.b16 %v449
    %v1512 = vunpack.c.l.b16 %v450
    %v1513 = vunpack.c.h.b16 %v450
    %v1514 = vunpack.c.l.b16 %v451
    %v1515 = vunpack.c.h.b16 %v451
    %v1516 = vunpack.c.l.b16 %v452
    %v1517 = vunpack.c.h.b16 %v452
    %v1518 = vunpack.c.l.b16 %v453
    %v1519 = vunpack.c.h.b16 %v453
    %v1520 = vunpack.c.l.b16 %v454
    %v1521 = vunpack.c.h.b16 %v454
    %v1522 = vunpack.c.l.b16 %v455
    %v1523 = vunpack.c.h.b16 %v455
    %v1524 = vunpack.c.l.b16 %v456
    %v1525 = vunpack.c.h.b16 %v456
    %v1526 = vunpack.c.l.b16 %v457
    %v1527 = vunpack.c.h.b16 %v457
    %v1528 = vunpack.c.l.b16 %v458
    %v1529 = vunpack.c.h.b16 %v458
    %v1530 = vunpack.c.l.b16 %v459
    %v1531 = vunpack.c.h.b16 %v459
    %v1532 = vunpack.c.l.b16 %v460
    %v1533 = vunpack.c.h.b16 %v460
    %v1534 = vunpack.c.l.b16 %v461
    %v1535 = vunpack.c.h.b16 %v461
    %v1536 = vunpack.c.l.b16 %v462
    %v1537 = vunpack.c.h.b16 %v462
    %v1538 = vunpack.c.l.b16 %v463
    %v1539 = vunpack.c.h.b16 %v463
    %v1540 = vunpack.c.l.b16 %v464
    %v1541 = vunpack.c.h.b16 %v464
    %v1542 = vunpack.c.l.b16 %v465
    %v1543 = vunpack.c.h.b16 %v465
    %v1544 = vunpack.c.l.b16 %v466
    %v1545 = vunpack.c.h.b16 %v466
    %v1546 = vunpack.c.l.b16 %v467
    %v1547 = vunpack.c.h.b16 %v467
    %v1548 = vunpack.c.l.b16 %v468
    %v1549 = vunpack.c.h.b16 %v468
    %v1550 = vunpack.c.l.b16 %v469
    %v1551 = vunpack.c.h.b16 %v469
    %v1552 = vunpack.c.l.b16 %v470
    %v1553 = vunpack.c.h.b16 %v470
    %v1554 = vunpack.c.l.b16 %v471
    %v1555 = vunpack.c.h.b16 %v471
    %v1556 = vunpack.c.l.b16 %v472
    %v1557 = vunpack.c.h.b16 %v472
    %v1558 = vunpack.c.l.b16 %v473
    %v1559 = vunpack.c.h.b16 %v473
    %v1560 = vunpack.c.l.b16 %v474
    %v1561 = vunpack.c.h.b16 %v474
    %v1562 = vunpack.c.l.b16 %v475
    %v1563 = vunpack.c.h.b16 %v475
    %v1564 = vunpack.c.l.b16 %v476
    %v1565 = vunpack.c.h.b16 %v476
    %v1566 = vunpack.c.l.b16 %v477
    %v1567 = vunpack.c.h.b16 %v477
    %v1568 = vunpack.c.l.b16 %v478
    %v1569 = vunpack.c.h.b16 %v478
    %v1570 = vunpack.c.l.b16 %v479
    %v1571 = vunpack.c.h.b16 %v479
    %v1572 = vunpack.c.l.b16 %v480
    %v1573 = vunpack.c.h.b16 %v480
    %v1574 = vunpack.c.l.b16 %v481
    %v1575 = vunpack.c.h.b16 %v481
    %v1576 = vunpack.c.l.b16 %v482
    %v1577 = vunpack.c.h.b16 %v482
    %v1578 = vunpack.c.l.b16 %v483
    %v1579 = vunpack.c.h.b16 %v483
    %v1580 = vunpack.c.l.b16 %v484
    %v1581 = vunpack.c.h.b16 %v484
    %v1582 = vunpack.c.l.b16 %v485
    %v1583 = vunpack.c.h.b16 %v485
    %v1584 = vunpack.c.l.b16 %v486
    %v1585 = vunpack.c.h.b16 %v486
    %v1586 = vunpack.c.l.b16 %v487
    %v1587 = vunpack.c.h.b16 %v487
    %v1588 = vunpack.c.l.b16 %v488
    %v1589 = vunpack.c.h.b16 %v488
    %v1590 = vunpack.c.l.b16 %v489
    %v1591 = vunpack.c.h.b16 %v489
    %v1592 = vunpack.c.l.b16 %v490
    %v1593 = vunpack.c.h.b16 %v490
    %v1594 = vunpack.c.l.b16 %v491
    %v1595 = vunpack.c.h.b16 %v491
    %v1596 = vunpack.c.l.b16 %v492
    %v1597 = vunpack.c.h.b16 %v492
    %v1598 = vunpack.c.l.b16 %v493
    %v1599 = vunpack.c.h.b16 %v493
    %v1600 = vunpack.c.l.b16 %v494
    %v1601 = vunpack.c.h.b16 %v494
    %v1602 = vunpack.c.l.b16 %v495
    %v1603 = vunpack.c.h.b16 %v495
    %v1604 = vunpack.c.l.b16 %v496
    %v1605 = vunpack.c.h.b16 %v496
    %v1606 = vunpack.c.l.b16 %v497
    %v1607 = vunpack.c.h.b16 %v497
    %v1608 = vunpack.c.l.b16 %v498
    %v1609 = vunpack.c.h.b16 %v498
    %v1610 = vunpack.c.l.b16 %v499
    %v1611 = vunpack.c.h.b16 %v499
    %v1612 = vunpack.c.l.b16 %v500
    %v1613 = vunpack.c.h.b16 %v500
    %v1614 = vunpack.c.l.b16 %v501
    %v1615 = vunpack.c.h.b16 %v501
    %v1616 = vunpack.c.l.b16 %v502
    %v1617 = vunpack.c.h.b16 %v502
    %v1618 = vunpack.c.l.b16 %v503
    %v1619 = vunpack.c.h.b16 %v503
    %v1620 = vunpack.c.l.b16 %v504
    %v1621 = vunpack.c.h.b16 %v504
    %v1622 = vunpack.c.l.b16 %v505
    %v1623 = vunpack.c.h.b16 %v505
    %v1624 = vunpack.c.l.b16 %v506
    %v1625 = vunpack.c.h.b16 %v506
    %v1626 = vunpack.c.l.b16 %v507
    %v1627 = vunpack.c.h.b16 %v507
    %v1628 = vunpack.c.l.b16 %v508
    %v1629 = vunpack.c.h.b16 %v508
    %v1630 = vunpack.c.l.b16 %v509
    %v1631 = vunpack.c.h.b16 %v509
    %v1632 = vunpack.c.l.b16 %v510
    %v1633 = vunpack.c.h.b16 %v510
    %v1634 = vunpack.c.l.b16 %v511
    %v1635 = vunpack.c.h.b16 %v511
    %v1636 = vunpack.c.l.b16 %v512
    %v1637 = vunpack.c.h.b16 %v512
    %v1638 = vunpack.c.l.b16 %v513
    %v1639 = vunpack.c.h.b16 %v513
    %v1640 = vunpack.c.l.b16 %v514
    %v1641 = vunpack.c.h.b16 %v514
    %v1642 = vunpack.c.l.b16 %v515
    %v1643 = vunpack.c.h.b16 %v515
    %v1644 = vunpack.c.l.b16 %v516
    %v1645 = vunpack.c.h.b16 %v516
    %v1646 = vunpack.c.l.b16 %v517
    %v1647 = vunpack.c.h.b16 %v517
    %v1648 = vunpack.c.l.b16 %v518
    %v1649 = vunpack.c.h.b16 %v518
    %v1650 = vunpack.c.l.b16 %v519
    %v1651 = vunpack.c.h.b16 %v519
    %v1652 = vunpack.c.l.b16 %v520
    %v1653 = vunpack.c.h.b16 %v520
    %v1654 = vunpack.c.l.b16 %v521
    %v1655 = vunpack.c.h.b16 %v521
    %v1656 = vunpack.c.l.b16 %v522
    %v1657 = vunpack.c.h.b16 %v522
    %v1658 = vunpack.c.l.b16 %v523
    %v1659 = vunpack.c.h.b16 %v523
    %v1660 = vunpack.c.l.b16 %v524
    %v1661 = vunpack.c.h.b16 %v524
    %v1662 = vunpack.c.l.b16 %v525
    %v1663 = vunpack.c.h.b16 %v525
    %v1664 = vunpack.c.l.b16 %v526
    %v1665 = vunpack.c.h.b16 %v526
    %v1666 = vunpack.c.l.b16 %v527
    %v1667 = vunpack.c.h.b16 %v527
    %v1668 = vunpack.c.l.b16 %v528
    %v1669 = vunpack.c.h.b16 %v528
    %v1670 = vunpack.c.l.b16 %v529
    %v1671 = vunpack.c.h.b16 %v529
    %v1672 = vunpack.c.l.b16 %v530
    %v1673 = vunpack.c.h.b16 %v530
    %v1674 = vunpack.c.l.b16 %v531
    %v1675 = vunpack.c.h.b16 %v531
    %v1676 = vunpack.c.l.b16 %v532
    %v1677 = vunpack.c.h.b16 %v532
    %v1678 = vunpack.c.l.b16 %v533
    %v1679 = vunpack.c.h.b16 %v533
    %v1680 = vunpack.c.l.b16 %v534
    %v1681 = vunpack.c.h.b16 %v534
    %v1682 = vunpack.c.l.b16 %v535
    %v1683 = vunpack.c.h.b16 %v535
    %v1684 = vunpack.c.l.b16 %v536
    %v1685 = vunpack.c.h.b16 %v536
    %v1686 = vunpack.c.l.b16 %v537
    %v1687 = vunpack.c.h.b16 %v537
    %v1688 = vunpack.c.l.b16 %v538
    %v1689 = vunpack.c.h.b16 %v538
    %v1690 = vunpack.c.l.b16 %v539
    %v1691 = vunpack.c.h.b16 %v539
    %v1692 = vunpack.c.l.b16 %v540
    %v1693 = vunpack.c.h.b16 %v540
    %v1694 = vunpack.c.l.b16 %v541
    %v1695 = vunpack.c.h.b16 %v541
    %v1696 = vunpack.c.l.b16 %v542
    %v1697 = vunpack.c.h.b16 %v542
    %v1698 = vunpack.c.l.b16 %v543
    %v1699 = vunpack.c.h.b16 %v543
    %v1700 = vunpack.c.l.b16 %v544
    %v1701 = vunpack.c.h.b16 %v544
    %v1702 = vunpack.c.l.b16 %v545
    %v1703 = vunpack.c.h.b16 %v545
    %v1704 = vpack.c.b16 %v938, %v936
    %v1705 = vpack.c.b16 %v939, %v937
    %v1706 = vpack.c.b16 %v942, %v940
    %v1707 = vpack.c.b16 %v943, %v941
    %v1708 = vpack.c.b16 %v946, %v944
    %v1709 = vpack.c.b16 %v947, %v945
    %v1710 = vpack.c.b16 %v950, %v948
    %v1711 = vpack.c.b16 %v951, %v949
    %v1712 = vpack.c.b16 %v954, %v952
    %v1713 = vpack.c.b16 %v955, %v953
    %v1714 = vpack.c.b16 %v958, %v956
    %v1715 = vpack.c.b16 %v959, %v957
    %v1716 = vpack.c.b16 %v962, %v960
    %v1717 = vpack.c.b16 %v963, %v961
    %v1718 = vpack.c.b16 %v966, %v964
    %v1719 = vpack.c.b16 %v967, %v965
    %v1720 = vpack.c.b16 %v970, %v968
    %v1721 = vpack.c.b16 %v971, %v969
    %v1722 = vpack.c.b16 %v974, %v972
    %v1723 = vpack.c.b16 %v975, %v973
    %v1724 = vpack.c.b16 %v978, %v976
    %v1725 = vpack.c.b16 %v979, %v977
    %v1726 = vpack.c.b16 %v982, %v980
    %v1727 = vpack.c.b16 %v983, %v981
    %v1728 = vpack.c.b16 %v986, %v984
    %v1729 = vpack.c.b16 %v987, %v985
    %v1730 = vpack.c.b16 %v990, %v988
    %v1731 = vpack.c.b16 %v991, %v989
    %v1732 = vpack.c.b16 %v994, %v992
    %v1733 = vpack.c.b16 %v995, %v993
    %v1734 = vpack.c.b16 %v998, %v996
    %v1735 = vpack.c.b16 %v999, %v997
    %v1736 = vpack.c.b16 %v1002, %v1000
    %v1737 = vpack.c.b16 %v1003, %v1001
    %v1738 = vpack.c.b16 %v1006, %v1004
    %v1739 = vpack.c.b16 %v1007, %v1005
    %v1740 = vpack.c.b16 %v1010, %v1008
    %v1741 = vpack.c.b16 %v1011, %v1009
    %v1742 = vpack.c.b16 %v1014, %v1012
    %v1743 = vpack.c.b16 %v1015, %v1013
    %v1744 = vpack.c.b16 %v1018, %v1016
    %v1745 = vpack.c.b16 %v1019, %v1017
    %v1746 = vpack.c.b16 %v1022, %v1020
    %v1747 = vpack.c.b16 %v1023, %v1021
    %v1748 = vpack.c.b16 %v1026, %v1024
    %v1749 = vpack.c.b16 %v1027, %v1025
    %v1750 = vpack.c.b16 %v1030, %v1028
    %v1751 = vpack.c.b16 %v1031, %v1029
    %v1752 = vpack.c.b16 %v1034, %v1032
    %v1753 = vpack.c.b16 %v1035, %v1033
    %v1754 = vpack.c.b16 %v1038, %v1036
    %v1755 = vpack.c.b16 %v1039, %v1037
    %v1756 = vpack.c.b16 %v1042, %v1040
    %v1757 = vpack.c.b16 %v1043, %v1041
    %v1758 = vpack.c.b16 %v1046, %v1044
    %v1759 = vpack.c.b16 %v1047, %v1045
    %v1760 = vpack.c.b16 %v1050, %v1048
    %v1761 = vpack.c.b16 %v1051, %v1049
    %v1762 = vpack.c.b16 %v1054, %v1052
    %v1763 = vpack.c.b16 %v1055, %v1053
    %v1764 = vpack.c.b16 %v1058, %v1056
    %v1765 = vpack.c.b16 %v1059, %v1057
    %v1766 = vpack.c.b16 %v1062, %v1060
    %v1767 = vpack.c.b16 %v1063, %v1061
    %v1768 = vpack.c.b16 %v1066, %v1064
    %v1769 = vpack.c.b16 %v1067, %v1065
    %v1770 = vpack.c.b16 %v1070, %v1068
    %v1771 = vpack.c.b16 %v1071, %v1069
    %v1772 = vpack.c.b16 %v1074, %v1072
    %v1773 = vpack.c.b16 %v1075, %v1073
    %v1774 = vpack.c.b16 %v1078, %v1076
    %v1775 = vpack.c.b16 %v1079, %v1077
    %v1776 = vpack.c.b16 %v1082, %v1080
    %v1777 = vpack.c.b16 %v1083, %v1081
    %v1778 = vpack.c.b16 %v1086, %v1084
    %v1779 = vpack.c.b16 %v1087, %v1085
    %v1780 = vpack.c.b16 %v1090, %v1088
    %v1781 = vpack.c.b16 %v1091, %v1089
    %v1782 = vpack.c.b16 %v1094, %v1092
    %v1783 = vpack.c.b16 %v1095, %v1093
    %v1784 = vpack.c.b16 %v1098, %v1096
    %v1785 = vpack.c.b16 %v1099, %v1097
    %v1786 = vpack.c.b16 %v1102, %v1100
    %v1787 = vpack.c.b16 %v1103, %v1101
    %v1788 = vpack.c.b16 %v1106, %v1104
    %v1789 = vpack.c.b16 %v1107, %v1105
    %v1790 = vpack.c.b16 %v1110, %v1108
    %v1791 = vpack.c.b16 %v1111, %v1109
    %v1792 = vpack.c.b16 %v1114, %v1112
    %v1793 = vpack.c.b16 %v1115, %v1113
    %v1794 = vpack.c.b16 %v1118, %v1116
    %v1795 = vpack.c.b16 %v1119, %v1117
    %v1796 = vpack.c.b16 %v1122, %v1120
    %v1797 = vpack.c.b16 %v1123, %v1121
    %v1798 = vpack.c.b16 %v1126, %v1124
    %v1799 = vpack.c.b16 %v1127, %v1125
    %v1800 = vpack.c.b16 %v1130, %v1128
    %v1801 = vpack.c.b16 %v1131, %v1129
    %v1802 = vpack.c.b16 %v1134, %v1132
    %v1803 = vpack.c.b16 %v1135, %v1133
    %v1804 = vpack.c.b16 %v1138, %v1136
    %v1805 = vpack.c.b16 %v1139, %v1137
    %v1806 = vpack.c.b16 %v1142, %v1140
    %v1807 = vpack.c.b16 %v1143, %v1141
    %v1808 = vpack.c.b16 %v1146, %v1144
    %v1809 = vpack.c.b16 %v1147, %v1145
    %v1810 = vpack.c.b16 %v1150, %v1148
    %v1811 = vpack.c.b16 %v1151, %v1149
    %v1812 = vpack.c.b16 %v1154, %v1152
    %v1813 = vpack.c.b16 %v1155, %v1153
    %v1814 = vpack.c.b16 %v1158, %v1156
    %v1815 = vpack.c.b16 %v1159, %v1157
    %v1816 = vpack.c.b16 %v1162, %v1160
    %v1817 = vpack.c.b16 %v1163, %v1161
    %v1818 = vpack.c.b16 %v1166, %v1164
    %v1819 = vpack.c.b16 %v1167, %v1165
    %v1820 = vpack.c.b16 %v1170, %v1168
    %v1821 = vpack.c.b16 %v1171, %v1169
    %v1822 = vpack.c.b16 %v1174, %v1172
    %v1823 = vpack.c.b16 %v1175, %v1173
    %v1824 = vpack.c.b16 %v1178, %v1176
    %v1825 = vpack.c.b16 %v1179, %v1177
    %v1826 = vpack.c.b16 %v1182, %v1180
    %v1827 = vpack.c.b16 %v1183, %v1181
    %v1828 = vpack.c.b16 %v1186, %v1184
    %v1829 = vpack.c.b16 %v1187, %v1185
    %v1830 = vpack.c.b16 %v1190, %v1188
    %v1831 = vpack.c.b16 %v1191, %v1189
    %v1832 = vpack.c.b16 %v1194, %v1192
    %v1833 = vpack.c.b16 %v1195, %v1193
    %v1834 = vpack.c.b16 %v1198, %v1196
    %v1835 = vpack.c.b16 %v1199, %v1197
    %v1836 = vpack.c.b16 %v1202, %v1200
    %v1837 = vpack.c.b16 %v1203, %v1201
    %v1838 = vpack.c.b16 %v1206, %v1204
    %v1839 = vpack.c.b16 %v1207, %v1205
    %v1840 = vpack.c.b16 %v1210, %v1208
    %v1841 = vpack.c.b16 %v1211, %v1209
    %v1842 = vpack.c.b16 %v1214, %v1212
    %v1843 = vpack.c.b16 %v1215, %v1213
    %v1844 = vpack.c.b16 %v1218, %v1216
    %v1845 = vpack.c.b16 %v1219, %v1217
    %v1846 = vpack.c.b16 %v1222, %v1220
    %v1847 = vpack.c.b16 %v1223, %v1221
    %v1848 = vpack.c.b16 %v1226, %v1224
    %v1849 = vpack.c.b16 %v1227, %v1225
    %v1850 = vpack.c.b16 %v1230, %v1228
    %v1851 = vpack.c.b16 %v1231, %v1229
    %v1852 = vpack.c.b16 %v1234, %v1232
    %v1853 = vpack.c.b16 %v1235, %v1233
    %v1854 = vpack.c.b16 %v1238, %v1236
    %v1855 = vpack.c.b16 %v1239, %v1237
    %v1856 = vpack.c.b16 %v1242, %v1240
    %v1857 = vpack.c.b16 %v1243, %v1241
    %v1858 = vpack.c.b16 %v1246, %v1244
    %v1859 = vpack.c.b16 %v1247, %v1245
    %v1860 = vpack.c.b16 %v1250, %v1248
    %v1861 = vpack.c.b16 %v1251, %v1249
    %v1862 = vpack.c.b16 %v1254, %v1252
    %v1863 = vpack.c.b16 %v1255, %v1253
    %v1864 = vpack.c.b16 %v1258, %v1256
    %v1865 = vpack.c.b16 %v1259, %v1257
    %v1866 = vpack.c.b16 %v1262, %v1260
    %v1867 = vpack.c.b16 %v1263, %v1261
    %v1868 = vpack.c.b16 %v1266, %v1264
    %v1869 = vpack.c.b16 %v1267, %v1265
    %v1870 = vpack.c.b16 %v1270, %v1268
    %v1871 = vpack.c.b16 %v1271, %v1269
    %v1872 = vpack.c.b16 %v1274, %v1272
    %v1873 = vpack.c.b16 %v1275, %v1273
    %v1874 = vpack.c.b16 %v1278, %v1276
    %v1875 = vpack.c.b16 %v1279, %v1277
    %v1876 = vpack.c.b16 %v1282, %v1280
    %v1877 = vpack.c.b16 %v1283, %v1281
    %v1878 = vpack.c.b16 %v1286, %v1284
    %v1879 = vpack.c.b16 %v1287, %v1285
    %v1880 = vpack.c.b16 %v1290, %v1288
    %v1881 = vpack.c.b16 %v1291, %v1289
    %v1882 = vpack.c.b16 %v1294, %v1292
    %v1883 = vpack.c.b16 %v1295, %v1293
    %v1884 = vpack.c.b16 %v1298, %v1296
    %v1885 = vpack.c.b16 %v1299, %v1297
    %v1886 = vpack.c.b16 %v1302, %v1300
    %v1887 = vpack.c.b16 %v1303, %v1301
    %v1888 = vpack.c.b16 %v1306, %v1304
    %v1889 = vpack.c.b16 %v1307, %v1305
    %v1890 = vpack.c.b16 %v1310, %v1308
    %v1891 = vpack.c.b16 %v1311, %v1309
    %v1892 = vpack.c.b16 %v1314, %v1312
    %v1893 = vpack.c.b16 %v1315, %v1313
    %v1894 = vpack.c.b16 %v1318, %v1316
    %v1895 = vpack.c.b16 %v1319, %v1317
    %v1896 = vpack.c.b16 %v1322, %v1320
    %v1897 = vpack.c.b16 %v1323, %v1321
    %v1898 = vpack.c.b16 %v1326, %v1324
    %v1899 = vpack.c.b16 %v1327, %v1325
    %v1900 = vpack.c.b16 %v1330, %v1328
    %v1901 = vpack.c.b16 %v1331, %v1329
    %v1902 = vpack.c.b16 %v1334, %v1332
    %v1903 = vpack.c.b16 %v1335, %v1333
    %v1904 = vpack.c.b16 %v1338, %v1336
    %v1905 = vpack.c.b16 %v1339, %v1337
    %v1906 = vpack.c.b16 %v1342, %v1340
    %v1907 = vpack.c.b16 %v1343, %v1341
    %v1908 = vpack.c.b16 %v1346, %v1344
    %v1909 = vpack.c.b16 %v1347, %v1345
    %v1910 = vpack.c.b16 %v1350, %v1348
    %v1911 = vpack.c.b16 %v1351, %v1349
    %v1912 = vpack.c.b16 %v1354, %v1352
    %v1913 = vpack.c.b16 %v1355, %v1353
    %v1914 = vpack.c.b16 %v1358, %v1356
    %v1915 = vpack.c.b16 %v1359, %v1357
    %v1916 = vpack.c.b16 %v1362, %v1360
    %v1917 = vpack.c.b16 %v1363, %v1361
    %v1918 = vpack.c.b16 %v1366, %v1364
    %v1919 = vpack.c.b16 %v1367, %v1365
    %v1920 = vpack.c.b16 %v1370, %v1368
    %v1921 = vpack.c.b16 %v1371, %v1369
    %v1922 = vpack.c.b16 %v1374, %v1372
    %v1923 = vpack.c.b16 %v1375, %v1373
    %v1924 = vpack.c.b16 %v1378, %v1376
    %v1925 = vpack.c.b16 %v1379, %v1377
    %v1926 = vpack.c.b16 %v1382, %v1380
    %v1927 = vpack.c.b16 %v1383, %v1381
    %v1928 = vpack.c.b16 %v1386, %v1384
    %v1929 = vpack.c.b16 %v1387, %v1385
    %v1930 = vpack.c.b16 %v1390, %v1388
    %v1931 = vpack.c.b16 %v1391, %v1389
    %v1932 = vpack.c.b16 %v1394, %v1392
    %v1933 = vpack.c.b16 %v1395, %v1393
    %v1934 = vpack.c.b16 %v1398, %v1396
    %v1935 = vpack.c.b16 %v1399, %v1397
    %v1936 = vpack.c.b16 %v1402, %v1400
    %v1937 = vpack.c.b16 %v1403, %v1401
    %v1938 = vpack.c.b16 %v1406, %v1404
    %v1939 = vpack.c.b16 %v1407, %v1405
    %v1940 = vpack.c.b16 %v1410, %v1408
    %v1941 = vpack.c.b16 %v1411, %v1409
    %v1942 = vpack.c.b16 %v1414, %v1412
    %v1943 = vpack.c.b16 %v1415, %v1413
    %v1944 = vpack.c.b16 %v1418, %v1416
    %v1945 = vpack.c.b16 %v1419, %v1417
    %v1946 = vpack.c.b16 %v1422, %v1420
    %v1947 = vpack.c.b16 %v1423, %v1421
    %v1948 = vpack.c.b16 %v1426, %v1424
    %v1949 = vpack.c.b16 %v1427, %v1425
    %v1950 = vpack.c.b16 %v1430, %v1428
    %v1951 = vpack.c.b16 %v1431, %v1429
    %v1952 = vpack.c.b16 %v1434, %v1432
    %v1953 = vpack.c.b16 %v1435, %v1433
    %v1954 = vpack.c.b16 %v1438, %v1436
    %v1955 = vpack.c.b16 %v1439, %v1437
    %v1956 = vpack.c.b16 %v1442, %v1440
    %v1957 = vpack.c.b16 %v1443, %v1441
    %v1958 = vpack.c.b16 %v1446, %v1444
    %v1959 = vpack.c.b16 %v1447, %v1445
    %v1960 = vpack.c.b16 %v1450, %v1448
    %v1961 = vpack.c.b16 %v1451, %v1449
    %v1962 = vpack.c.b16 %v1454, %v1452
    %v1963 = vpack.c.b16 %v1455, %v1453
    %v1964 = vpack.c.b16 %v1458, %v1456
    %v1965 = vpack.c.b16 %v1459, %v1457
    %v1966 = vpack.c.b16 %v1462, %v1460
    %v1967 = vpack.c.b16 %v1463, %v1461
    %v1968 = vpack.c.b16 %v1466, %v1464
    %v1969 = vpack.c.b16 %v1467, %v1465
    %v1970 = vpack.c.b16 %v1470, %v1468
    %v1971 = vpack.c.b16 %v1471, %v1469
    %v1972 = vpack.c.b16 %v1474, %v1472
    %v1973 = vpack.c.b16 %v1475, %v1473
    %v1974 = vpack.c.b16 %v1478, %v1476
    %v1975 = vpack.c.b16 %v1479, %v1477
    %v1976 = vpack.c.b16 %v1482, %v1480
    %v1977 = vpack.c.b16 %v1483, %v1481
    %v1978 = vpack.c.b16 %v1486, %v1484
    %v1979 = vpack.c.b16 %v1487, %v1485
    %v1980 = vpack.c.b16 %v1490, %v1488
    %v1981 = vpack.c.b16 %v1491, %v1489
    %v1982 = vpack.c.b16 %v1494, %v1492
    %v1983 = vpack.c.b16 %v1495, %v1493
    %v1984 = vpack.c.b16 %v1498, %v1496
    %v1985 = vpack.c.b16 %v1499, %v1497
    %v1986 = vpack.c.b16 %v1502, %v1500
    %v1987 = vpack.c.b16 %v1503, %v1501
    %v1988 = vpack.c.b16 %v1506, %v1504
    %v1989 = vpack.c.b16 %v1507, %v1505
    %v1990 = vpack.c.b16 %v1510, %v1508
    %v1991 = vpack.c.b16 %v1511, %v1509
    %v1992 = vpack.c.b16 %v1514, %v1512
    %v1993 = vpack.c.b16 %v1515, %v1513
    %v1994 = vpack.c.b16 %v1518, %v1516
    %v1995 = vpack.c.b16 %v1519, %v1517
    %v1996 = vpack.c.b16 %v1522, %v1520
    %v1997 = vpack.c.b16 %v1523, %v1521
    %v1998 = vpack.c.b16 %v1526, %v1524
    %v1999 = vpack.c.b16 %v1527, %v1525
    %v2000 = vpack.c.b16 %v1530, %v1528
    %v2001 = vpack.c.b16 %v1531, %v1529
    %v2002 = vpack.c.b16 %v1534, %v1532
    %v2003 = vpack.c.b16 %v1535, %v1533
    %v2004 = vpack.c.b16 %v1538, %v1536
    %v2005 = vpack.c.b16 %v1539, %v1537
    %v2006 = vpack.c.b16 %v1542, %v1540
    %v2007 = vpack.c.b16 %v1543, %v1541
    %v2008 = vpack.c.b16 %v1546, %v1544
    %v2009 = vpack.c.b16 %v1547, %v1545
    %v2010 = vpack.c.b16 %v1550, %v1548
    %v2011 = vpack.c.b16 %v1551, %v1549
    %v2012 = vpack.c.b16 %v1554, %v1552
    %v2013 = vpack.c.b16 %v1555, %v1553
    %v2014 = vpack.c.b16 %v1558, %v1556
    %v2015 = vpack.c.b16 %v1559, %v1557
    %v2016 = vpack.c.b16 %v1562, %v1560
    %v2017 = vpack.c.b16 %v1563, %v1561
    %v2018 = vpack.c.b16 %v1566, %v1564
    %v2019 = vpack.c.b16 %v1567, %v1565
    %v2020 = vpack.c.b16 %v1570, %v1568
    %v2021 = vpack.c.b16 %v1571, %v1569
    %v2022 = vpack.c.b16 %v1574, %v1572
    %v2023 = vpack.c.b16 %v1575, %v1573
    %v2024 = vpack.c.b16 %v1578, %v1576
    %v2025 = vpack.c.b16 %v1579, %v1577
    %v2026 = vpack.c.b16 %v1582, %v1580
    %v2027 = vpack.c.b16 %v1583, %v1581
    %v2028 = vpack.c.b16 %v1586, %v1584
    %v2029 = vpack.c.b16 %v1587, %v1585
    %v2030 = vpack.c.b16 %v1590, %v1588
    %v2031 = vpack.c.b16 %v1591, %v1589
    %v2032 = vpack.c.b16 %v1594, %v1592
    %v2033 = vpack.c.b16 %v1595, %v1593
    %v2034 = vpack.c.b16 %v1598, %v1596
    %v2035 = vpack.c.b16 %v1599, %v1597
    %v2036 = vpack.c.b16 %v1602, %v1600
    %v2037 = vpack.c.b16 %v1603, %v1601
    %v2038 = vpack.c.b16 %v1606, %v1604
    %v2039 = vpack.c.b16 %v1607, %v1605
    %v2040 = vpack.c.b16 %v1610, %v1608
    %v2041 = vpack.c.b16 %v1611, %v1609
    %v2042 = vpack.c.b16 %v1614, %v1612
    %v2043 = vpack.c.b16 %v1615, %v1613
    %v2044 = vpack.c.b16 %v1618, %v1616
    %v2045 = vpack.c.b16 %v1619, %v1617
    %v2046 = vpack.c.b16 %v1622, %v1620
    %v2047 = vpack.c.b16 %v1623, %v1621
    %v2048 = vpack.c.b16 %v1626, %v1624
    %v2049 = vpack.c.b16 %v1627, %v1625
    %v2050 = vpack.c.b16 %v1630, %v1628
    %v2051 = vpack.c.b16 %v1631, %v1629
    %v2052 = vpack.c.b16 %v1634, %v1632
    %v2053 = vpack.c.b16 %v1635, %v1633
    %v2054 = vpack.c.b16 %v1638, %v1636
    %v2055 = vpack.c.b16 %v1639, %v1637
    %v2056 = vpack.c.b16 %v1642, %v1640
    %v2057 = vpack.c.b16 %v1643, %v1641
    %v2058 = vpack.c.b16 %v1646, %v1644
    %v2059 = vpack.c.b16 %v1647, %v1645
    %v2060 = vpack.c.b16 %v1650, %v1648
    %v2061 = vpack.c.b16 %v1651, %v1649
    %v2062 = vpack.c.b16 %v1654, %v1652
    %v2063 = vpack.c.b16 %v1655, %v1653
    %v2064 = vpack.c.b16 %v1658, %v1656
    %v2065 = vpack.c.b16 %v1659, %v1657
    %v2066 = vpack.c.b16 %v1662, %v1660
    %v2067 = vpack.c.b16 %v1663, %v1661
    %v2068 = vpack.c.b16 %v1666, %v1664
    %v2069 = vpack.c.b16 %v1667, %v1665
    %v2070 = vpack.c.b16 %v1670, %v1668
    %v2071 = vpack.c.b16 %v1671, %v1669
    %v2072 = vpack.c.b16 %v1674, %v1672
    %v2073 = vpack.c.b16 %v1675, %v1673
    %v2074 = vpack.c.b16 %v1678, %v1676
    %v2075 = vpack.c.b16 %v1679, %v1677
    %v2076 = vpack.c.b16 %v1682, %v1680
    %v2077 = vpack.c.b16 %v1683, %v1681
    %v2078 = vpack.c.b16 %v1686, %v1684
    %v2079 = vpack.c.b16 %v1687, %v1685
    %v2080 = vpack.c.b16 %v1690, %v1688
    %v2081 = vpack.c.b16 %v1691, %v1689
    %v2082 = vpack.c.b16 %v1694, %v1692
    %v2083 = vpack.c.b16 %v1695, %v1693
    %v2084 = vpack.c.b16 %v1698, %v1696
    %v2085 = vpack.c.b16 %v1699, %v1697
    %v2086 = vpack.c.b16 %v1702, %v1700
    %v2087 = vpack.c.b16 %v1703, %v1701
    %2472 = vmatpush.bf16.msra.mxu0 %v1718
    %2473 = vmatpush.bf16.msra.mxu0 %v1716
    %2474 = vmatpush.bf16.msra.mxu0 %v1714
    %2475 = vmatpush.bf16.msra.mxu0 %v1712
    %2476 = vmatpush.bf16.msra.mxu0 %v1710
    %2477 = vmatpush.bf16.msra.mxu0 %v1708
    %2478 = vmatpush.bf16.msra.mxu0 %v1706
    %2479 = vmatpush.bf16.msra.mxu0 %v1704
    %2480 = vmatmul.bf16.gmra.mxu0 %v138
    %v2481 = vpop.f32.mrf.mxu0
    %v2482 = vadd.f32 %v548, %v2481
    %v2483 = vpop.f32.mrf.mxu0
    %2484 = vdwg.mxu0
    %2485 = vmatpush.bf16.msra.mxu0 %v1734
    %2486 = vmatpush.bf16.msra.mxu0 %v1732
    %2487 = vmatpush.bf16.msra.mxu0 %v1730
    %2488 = vmatpush.bf16.msra.mxu0 %v1728
    %2489 = vmatpush.bf16.msra.mxu0 %v1726
    %2490 = vmatpush.bf16.msra.mxu0 %v1724
    %2491 = vmatpush.bf16.msra.mxu0 %v1722
    %2492 = vmatpush.bf16.msra.mxu0 %v1720
    %2493 = vmatmul.bf16.gmra.mxu0 %v139
    %v2494 = vpop.f32.mrf.mxu0
    %v2495 = vadd.f32 %v2482, %v2494
    %v2496 = vpop.f32.mrf.mxu0
    %2497 = vdwg.mxu0
    %2498 = vmatpush.bf16.msra.mxu0 %v1750
    %2499 = vmatpush.bf16.msra.mxu0 %v1748
    %2500 = vmatpush.bf16.msra.mxu0 %v1746
    %2501 = vmatpush.bf16.msra.mxu0 %v1744
    %2502 = vmatpush.bf16.msra.mxu0 %v1742
    %2503 = vmatpush.bf16.msra.mxu0 %v1740
    %2504 = vmatpush.bf16.msra.mxu0 %v1738
    %2505 = vmatpush.bf16.msra.mxu0 %v1736
    %2506 = vmatmul.bf16.gmra.mxu0 %v140
    %v2507 = vpop.f32.mrf.mxu0
    %v2508 = vadd.f32 %v2495, %v2507
    %v2509 = vpop.f32.mrf.mxu0
    %2510 = vdwg.mxu0
    %2511 = vmatpush.bf16.msra.mxu0 %v1766
    %2512 = vmatpush.bf16.msra.mxu0 %v1764
    %2513 = vmatpush.bf16.msra.mxu0 %v1762
    %2514 = vmatpush.bf16.msra.mxu0 %v1760
    %2515 = vmatpush.bf16.msra.mxu0 %v1758
    %2516 = vmatpush.bf16.msra.mxu0 %v1756
    %2517 = vmatpush.bf16.msra.mxu0 %v1754
    %2518 = vmatpush.bf16.msra.mxu0 %v1752
    %2519 = vmatmul.bf16.gmra.mxu0 %v141
    %v2520 = vpop.f32.mrf.mxu0
    %v2521 = vadd.f32 %v2508, %v2520
    %v2522 = vpop.f32.mrf.mxu0
    %2523 = vdwg.mxu0
    %2524 = vmatpush.bf16.msra.mxu0 %v1782
    %2525 = vmatpush.bf16.msra.mxu0 %v1780
    %2526 = vmatpush.bf16.msra.mxu0 %v1778
    %2527 = vmatpush.bf16.msra.mxu0 %v1776
    %2528 = vmatpush.bf16.msra.mxu0 %v1774
    %2529 = vmatpush.bf16.msra.mxu0 %v1772
    %2530 = vmatpush.bf16.msra.mxu0 %v1770
    %2531 = vmatpush.bf16.msra.mxu0 %v1768
    %2532 = vmatmul.bf16.gmra.mxu0 %v142
    %v2533 = vpop.f32.mrf.mxu0
    %v2534 = vadd.f32 %v2521, %v2533
    %v2535 = vpop.f32.mrf.mxu0
    %2536 = vdwg.mxu0
    %2537 = vmatpush.bf16.msra.mxu0 %v1798
    %2538 = vmatpush.bf16.msra.mxu0 %v1796
    %2539 = vmatpush.bf16.msra.mxu0 %v1794
    %2540 = vmatpush.bf16.msra.mxu0 %v1792
    %2541 = vmatpush.bf16.msra.mxu0 %v1790
    %2542 = vmatpush.bf16.msra.mxu0 %v1788
    %2543 = vmatpush.bf16.msra.mxu0 %v1786
    %2544 = vmatpush.bf16.msra.mxu0 %v1784
    %2545 = vmatmul.bf16.gmra.mxu0 %v143
    %v2546 = vpop.f32.mrf.mxu0
    %v2547 = vadd.f32 %v2534, %v2546
    %v2548 = vpop.f32.mrf.mxu0
    %2549 = vdwg.mxu0
    %2550 = vmatpush.bf16.msra.mxu0 %v1814
    %2551 = vmatpush.bf16.msra.mxu0 %v1812
    %2552 = vmatpush.bf16.msra.mxu0 %v1810
    %2553 = vmatpush.bf16.msra.mxu0 %v1808
    %2554 = vmatpush.bf16.msra.mxu0 %v1806
    %2555 = vmatpush.bf16.msra.mxu0 %v1804
    %2556 = vmatpush.bf16.msra.mxu0 %v1802
    %2557 = vmatpush.bf16.msra.mxu0 %v1800
    %2558 = vmatmul.bf16.gmra.mxu0 %v144
    %v2559 = vpop.f32.mrf.mxu0
    %v2560 = vadd.f32 %v2547, %v2559
    %v2561 = vpop.f32.mrf.mxu0
    %2562 = vdwg.mxu0
    %2563 = vmatpush.bf16.msra.mxu0 %v1830
    %2564 = vmatpush.bf16.msra.mxu0 %v1828
    %2565 = vmatpush.bf16.msra.mxu0 %v1826
    %2566 = vmatpush.bf16.msra.mxu0 %v1824
    %2567 = vmatpush.bf16.msra.mxu0 %v1822
    %2568 = vmatpush.bf16.msra.mxu0 %v1820
    %2569 = vmatpush.bf16.msra.mxu0 %v1818
    %2570 = vmatpush.bf16.msra.mxu0 %v1816
    %2571 = vmatmul.bf16.gmra.mxu0 %v145
    %v2572 = vpop.f32.mrf.mxu0
    %v2573 = vadd.f32 %v2560, %v2572
    %v2574 = vpop.f32.mrf.mxu0
    %2575 = vdwg.mxu0
    %2576 = vmatpush.bf16.msra.mxu0 %v1846
    %2577 = vmatpush.bf16.msra.mxu0 %v1844
    %2578 = vmatpush.bf16.msra.mxu0 %v1842
    %2579 = vmatpush.bf16.msra.mxu0 %v1840
    %2580 = vmatpush.bf16.msra.mxu0 %v1838
    %2581 = vmatpush.bf16.msra.mxu0 %v1836
    %2582 = vmatpush.bf16.msra.mxu0 %v1834
    %2583 = vmatpush.bf16.msra.mxu0 %v1832
    %2584 = vmatmul.bf16.gmra.mxu0 %v146
    %v2585 = vpop.f32.mrf.mxu0
    %v2586 = vadd.f32 %v2573, %v2585
    %v2587 = vpop.f32.mrf.mxu0
    %2588 = vdwg.mxu0
    %2589 = vmatpush.bf16.msra.mxu0 %v1862
    %2590 = vmatpush.bf16.msra.mxu0 %v1860
    %2591 = vmatpush.bf16.msra.mxu0 %v1858
    %2592 = vmatpush.bf16.msra.mxu0 %v1856
    %2593 = vmatpush.bf16.msra.mxu0 %v1854
    %2594 = vmatpush.bf16.msra.mxu0 %v1852
    %2595 = vmatpush.bf16.msra.mxu0 %v1850
    %2596 = vmatpush.bf16.msra.mxu0 %v1848
    %2597 = vmatmul.bf16.gmra.mxu0 %v147
    %v2598 = vpop.f32.mrf.mxu0
    %v2599 = vadd.f32 %v2586, %v2598
    %v2600 = vpop.f32.mrf.mxu0
    %2601 = vdwg.mxu0
    %2602 = vmatpush.bf16.msra.mxu0 %v1878
    %2603 = vmatpush.bf16.msra.mxu0 %v1876
    %2604 = vmatpush.bf16.msra.mxu0 %v1874
    %2605 = vmatpush.bf16.msra.mxu0 %v1872
    %2606 = vmatpush.bf16.msra.mxu0 %v1870
    %2607 = vmatpush.bf16.msra.mxu0 %v1868
    %2608 = vmatpush.bf16.msra.mxu0 %v1866
    %2609 = vmatpush.bf16.msra.mxu0 %v1864
    %2610 = vmatmul.bf16.gmra.mxu0 %v148
    %v2611 = vpop.f32.mrf.mxu0
    %v2612 = vadd.f32 %v2599, %v2611
    %v2613 = vpop.f32.mrf.mxu0
    %2614 = vdwg.mxu0
    %2615 = vmatpush.bf16.msra.mxu0 %v1894
    %2616 = vmatpush.bf16.msra.mxu0 %v1892
    %2617 = vmatpush.bf16.msra.mxu0 %v1890
    %2618 = vmatpush.bf16.msra.mxu0 %v1888
    %2619 = vmatpush.bf16.msra.mxu0 %v1886
    %2620 = vmatpush.bf16.msra.mxu0 %v1884
    %2621 = vmatpush.bf16.msra.mxu0 %v1882
    %2622 = vmatpush.bf16.msra.mxu0 %v1880
    %2623 = vmatmul.bf16.gmra.mxu0 %v149
    %v2624 = vpop.f32.mrf.mxu0
    %v2625 = vadd.f32 %v2612, %v2624
    %v2626 = vpop.f32.mrf.mxu0
    %2627 = vdwg.mxu0
    %2628 = vmatpush.bf16.msra.mxu0 %v1910
    %2629 = vmatpush.bf16.msra.mxu0 %v1908
    %2630 = vmatpush.bf16.msra.mxu0 %v1906
    %2631 = vmatpush.bf16.msra.mxu0 %v1904
    %2632 = vmatpush.bf16.msra.mxu0 %v1902
    %2633 = vmatpush.bf16.msra.mxu0 %v1900
    %2634 = vmatpush.bf16.msra.mxu0 %v1898
    %2635 = vmatpush.bf16.msra.mxu0 %v1896
    %2636 = vmatmul.bf16.gmra.mxu0 %v150
    %v2637 = vpop.f32.mrf.mxu0
    %v2638 = vadd.f32 %v2625, %v2637
    %v2639 = vpop.f32.mrf.mxu0
    %2640 = vdwg.mxu0
    %2641 = vmatpush.bf16.msra.mxu0 %v1926
    %2642 = vmatpush.bf16.msra.mxu0 %v1924
    %2643 = vmatpush.bf16.msra.mxu0 %v1922
    %2644 = vmatpush.bf16.msra.mxu0 %v1920
    %2645 = vmatpush.bf16.msra.mxu0 %v1918
    %2646 = vmatpush.bf16.msra.mxu0 %v1916
    %2647 = vmatpush.bf16.msra.mxu0 %v1914
    %2648 = vmatpush.bf16.msra.mxu0 %v1912
    %2649 = vmatmul.bf16.gmra.mxu0 %v151
    %v2650 = vpop.f32.mrf.mxu0
    %v2651 = vadd.f32 %v2638, %v2650
    %v2652 = vpop.f32.mrf.mxu0
    %2653 = vdwg.mxu0
    %2654 = vmatpush.bf16.msra.mxu0 %v1942
    %2655 = vmatpush.bf16.msra.mxu0 %v1940
    %2656 = vmatpush.bf16.msra.mxu0 %v1938
    %2657 = vmatpush.bf16.msra.mxu0 %v1936
    %2658 = vmatpush.bf16.msra.mxu0 %v1934
    %2659 = vmatpush.bf16.msra.mxu0 %v1932
    %2660 = vmatpush.bf16.msra.mxu0 %v1930
    %2661 = vmatpush.bf16.msra.mxu0 %v1928
    %2662 = vmatmul.bf16.gmra.mxu0 %v152
    %v2663 = vpop.f32.mrf.mxu0
    %v2664 = vadd.f32 %v2651, %v2663
    %v2665 = vpop.f32.mrf.mxu0
    %2666 = vdwg.mxu0
    %2667 = vmatpush.bf16.msra.mxu0 %v1958
    %2668 = vmatpush.bf16.msra.mxu0 %v1956
    %2669 = vmatpush.bf16.msra.mxu0 %v1954
    %2670 = vmatpush.bf16.msra.mxu0 %v1952
    %2671 = vmatpush.bf16.msra.mxu0 %v1950
    %2672 = vmatpush.bf16.msra.mxu0 %v1948
    %2673 = vmatpush.bf16.msra.mxu0 %v1946
    %2674 = vmatpush.bf16.msra.mxu0 %v1944
    %2675 = vmatmul.bf16.gmra.mxu0 %v153
    %v2676 = vpop.f32.mrf.mxu0
    %v2677 = vadd.f32 %v2664, %v2676
    %v2678 = vpop.f32.mrf.mxu0
    %2679 = vdwg.mxu0
    %2680 = vmatpush.bf16.msra.mxu0 %v1974
    %2681 = vmatpush.bf16.msra.mxu0 %v1972
    %2682 = vmatpush.bf16.msra.mxu0 %v1970
    %2683 = vmatpush.bf16.msra.mxu0 %v1968
    %2684 = vmatpush.bf16.msra.mxu0 %v1966
    %2685 = vmatpush.bf16.msra.mxu0 %v1964
    %2686 = vmatpush.bf16.msra.mxu0 %v1962
    %2687 = vmatpush.bf16.msra.mxu0 %v1960
    %2688 = vmatmul.bf16.gmra.mxu0 %v154
    %v2689 = vpop.f32.mrf.mxu0
    %v2690 = vadd.f32 %v2677, %v2689
    %v2691 = vpop.f32.mrf.mxu0
    %2692 = vdwg.mxu0
    %2693 = vmatpush.bf16.msra.mxu0 %v1990
    %2694 = vmatpush.bf16.msra.mxu0 %v1988
    %2695 = vmatpush.bf16.msra.mxu0 %v1986
    %2696 = vmatpush.bf16.msra.mxu0 %v1984
    %2697 = vmatpush.bf16.msra.mxu0 %v1982
    %2698 = vmatpush.bf16.msra.mxu0 %v1980
    %2699 = vmatpush.bf16.msra.mxu0 %v1978
    %2700 = vmatpush.bf16.msra.mxu0 %v1976
    %2701 = vmatmul.bf16.gmra.mxu0 %v155
    %v2702 = vpop.f32.mrf.mxu0
    %v2703 = vadd.f32 %v2690, %v2702
    %v2704 = vpop.f32.mrf.mxu0
    %2705 = vdwg.mxu0
    %2706 = vmatpush.bf16.msra.mxu0 %v2006
    %2707 = vmatpush.bf16.msra.mxu0 %v2004
    %2708 = vmatpush.bf16.msra.mxu0 %v2002
    %2709 = vmatpush.bf16.msra.mxu0 %v2000
    %2710 = vmatpush.bf16.msra.mxu0 %v1998
    %2711 = vmatpush.bf16.msra.mxu0 %v1996
    %2712 = vmatpush.bf16.msra.mxu0 %v1994
    %2713 = vmatpush.bf16.msra.mxu0 %v1992
    %2714 = vmatmul.bf16.gmra.mxu0 %v156
    %v2715 = vpop.f32.mrf.mxu0
    %v2716 = vadd.f32 %v2703, %v2715
    %v2717 = vpop.f32.mrf.mxu0
    %2718 = vdwg.mxu0
    %2719 = vmatpush.bf16.msra.mxu0 %v2022
    %2720 = vmatpush.bf16.msra.mxu0 %v2020
    %2721 = vmatpush.bf16.msra.mxu0 %v2018
    %2722 = vmatpush.bf16.msra.mxu0 %v2016
    %2723 = vmatpush.bf16.msra.mxu0 %v2014
    %2724 = vmatpush.bf16.msra.mxu0 %v2012
    %2725 = vmatpush.bf16.msra.mxu0 %v2010
    %2726 = vmatpush.bf16.msra.mxu0 %v2008
    %2727 = vmatmul.bf16.gmra.mxu0 %v157
    %v2728 = vpop.f32.mrf.mxu0
    %v2729 = vadd.f32 %v2716, %v2728
    %v2730 = vpop.f32.mrf.mxu0
    %2731 = vdwg.mxu0
    %2732 = vmatpush.bf16.msra.mxu0 %v2038
    %2733 = vmatpush.bf16.msra.mxu0 %v2036
    %2734 = vmatpush.bf16.msra.mxu0 %v2034
    %2735 = vmatpush.bf16.msra.mxu0 %v2032
    %2736 = vmatpush.bf16.msra.mxu0 %v2030
    %2737 = vmatpush.bf16.msra.mxu0 %v2028
    %2738 = vmatpush.bf16.msra.mxu0 %v2026
    %2739 = vmatpush.bf16.msra.mxu0 %v2024
    %2740 = vmatmul.bf16.gmra.mxu0 %v158
    %v2741 = vpop.f32.mrf.mxu0
    %v2742 = vadd.f32 %v2729, %v2741
    %v2743 = vpop.f32.mrf.mxu0
    %2744 = vdwg.mxu0
    %2745 = vmatpush.bf16.msra.mxu0 %v2054
    %2746 = vmatpush.bf16.msra.mxu0 %v2052
    %2747 = vmatpush.bf16.msra.mxu0 %v2050
    %2748 = vmatpush.bf16.msra.mxu0 %v2048
    %2749 = vmatpush.bf16.msra.mxu0 %v2046
    %2750 = vmatpush.bf16.msra.mxu0 %v2044
    %2751 = vmatpush.bf16.msra.mxu0 %v2042
    %2752 = vmatpush.bf16.msra.mxu0 %v2040
    %2753 = vmatmul.bf16.gmra.mxu0 %v159
    %v2754 = vpop.f32.mrf.mxu0
    %v2755 = vadd.f32 %v2742, %v2754
    %v2756 = vpop.f32.mrf.mxu0
    %2757 = vdwg.mxu0
    %2758 = vmatpush.bf16.msra.mxu0 %v2070
    %2759 = vmatpush.bf16.msra.mxu0 %v2068
    %2760 = vmatpush.bf16.msra.mxu0 %v2066
    %2761 = vmatpush.bf16.msra.mxu0 %v2064
    %2762 = vmatpush.bf16.msra.mxu0 %v2062
    %2763 = vmatpush.bf16.msra.mxu0 %v2060
    %2764 = vmatpush.bf16.msra.mxu0 %v2058
    %2765 = vmatpush.bf16.msra.mxu0 %v2056
    %2766 = vmatmul.bf16.gmra.mxu0 %v160
    %v2767 = vpop.f32.mrf.mxu0
    %v2768 = vadd.f32 %v2755, %v2767
    %v2769 = vpop.f32.mrf.mxu0
    %2770 = vdwg.mxu0
    %2771 = vmatpush.bf16.msra.mxu0 %v2086
    %2772 = vmatpush.bf16.msra.mxu0 %v2084
    %2773 = vmatpush.bf16.msra.mxu0 %v2082
    %2774 = vmatpush.bf16.msra.mxu0 %v2080
    %2775 = vmatpush.bf16.msra.mxu0 %v2078
    %2776 = vmatpush.bf16.msra.mxu0 %v2076
    %2777 = vmatpush.bf16.msra.mxu0 %v2074
    %2778 = vmatpush.bf16.msra.mxu0 %v2072
    %2779 = vmatmul.bf16.gmra.mxu0 %v161
    %v2780 = vpop.f32.mrf.mxu0
    %v2781 = vadd.f32 %v2768, %v2780
    %v2782 = vpop.f32.mrf.mxu0
    %2783 = vdwg.mxu0
    %2784 = vmatpush.bf16.msra.mxu0 %v1719
    %2785 = vmatpush.bf16.msra.mxu0 %v1717
    %2786 = vmatpush.bf16.msra.mxu0 %v1715
    %2787 = vmatpush.bf16.msra.mxu0 %v1713
    %2788 = vmatpush.bf16.msra.mxu0 %v1711
    %2789 = vmatpush.bf16.msra.mxu0 %v1709
    %2790 = vmatpush.bf16.msra.mxu0 %v1707
    %2791 = vmatpush.bf16.msra.mxu0 %v1705
    %2792 = vmatmul.bf16.gmra.mxu0 %v138
    %v2793 = vpop.f32.mrf.mxu0
    %v2794 = vadd.f32 %v549, %v2793
    %v2795 = vpop.f32.mrf.mxu0
    %2796 = vdwg.mxu0
    %2797 = vmatpush.bf16.msra.mxu0 %v1735
    %2798 = vmatpush.bf16.msra.mxu0 %v1733
    %2799 = vmatpush.bf16.msra.mxu0 %v1731
    %2800 = vmatpush.bf16.msra.mxu0 %v1729
    %2801 = vmatpush.bf16.msra.mxu0 %v1727
    %2802 = vmatpush.bf16.msra.mxu0 %v1725
    %2803 = vmatpush.bf16.msra.mxu0 %v1723
    %2804 = vmatpush.bf16.msra.mxu0 %v1721
    %2805 = vmatmul.bf16.gmra.mxu0 %v139
    %v2806 = vpop.f32.mrf.mxu0
    %v2807 = vadd.f32 %v2794, %v2806
    %v2808 = vpop.f32.mrf.mxu0
    %2809 = vdwg.mxu0
    %2810 = vmatpush.bf16.msra.mxu0 %v1751
    %2811 = vmatpush.bf16.msra.mxu0 %v1749
    %2812 = vmatpush.bf16.msra.mxu0 %v1747
    %2813 = vmatpush.bf16.msra.mxu0 %v1745
    %2814 = vmatpush.bf16.msra.mxu0 %v1743
    %2815 = vmatpush.bf16.msra.mxu0 %v1741
    %2816 = vmatpush.bf16.msra.mxu0 %v1739
    %2817 = vmatpush.bf16.msra.mxu0 %v1737
    %2818 = vmatmul.bf16.gmra.mxu0 %v140
    %v2819 = vpop.f32.mrf.mxu0
    %v2820 = vadd.f32 %v2807, %v2819
    %v2821 = vpop.f32.mrf.mxu0
    %2822 = vdwg.mxu0
    %2823 = vmatpush.bf16.msra.mxu0 %v1767
    %2824 = vmatpush.bf16.msra.mxu0 %v1765
    %2825 = vmatpush.bf16.msra.mxu0 %v1763
    %2826 = vmatpush.bf16.msra.mxu0 %v1761
    %2827 = vmatpush.bf16.msra.mxu0 %v1759
    %2828 = vmatpush.bf16.msra.mxu0 %v1757
    %2829 = vmatpush.bf16.msra.mxu0 %v1755
    %2830 = vmatpush.bf16.msra.mxu0 %v1753
    %2831 = vmatmul.bf16.gmra.mxu0 %v141
    %v2832 = vpop.f32.mrf.mxu0
    %v2833 = vadd.f32 %v2820, %v2832
    %v2834 = vpop.f32.mrf.mxu0
    %2835 = vdwg.mxu0
    %2836 = vmatpush.bf16.msra.mxu0 %v1783
    %2837 = vmatpush.bf16.msra.mxu0 %v1781
    %2838 = vmatpush.bf16.msra.mxu0 %v1779
    %2839 = vmatpush.bf16.msra.mxu0 %v1777
    %2840 = vmatpush.bf16.msra.mxu0 %v1775
    %2841 = vmatpush.bf16.msra.mxu0 %v1773
    %2842 = vmatpush.bf16.msra.mxu0 %v1771
    %2843 = vmatpush.bf16.msra.mxu0 %v1769
    %2844 = vmatmul.bf16.gmra.mxu0 %v142
    %v2845 = vpop.f32.mrf.mxu0
    %v2846 = vadd.f32 %v2833, %v2845
    %v2847 = vpop.f32.mrf.mxu0
    %2848 = vdwg.mxu0
    %2849 = vmatpush.bf16.msra.mxu0 %v1799
    %2850 = vmatpush.bf16.msra.mxu0 %v1797
    %2851 = vmatpush.bf16.msra.mxu0 %v1795
    %2852 = vmatpush.bf16.msra.mxu0 %v1793
    %2853 = vmatpush.bf16.msra.mxu0 %v1791
    %2854 = vmatpush.bf16.msra.mxu0 %v1789
    %2855 = vmatpush.bf16.msra.mxu0 %v1787
    %2856 = vmatpush.bf16.msra.mxu0 %v1785
    %2857 = vmatmul.bf16.gmra.mxu0 %v143
    %v2858 = vpop.f32.mrf.mxu0
    %v2859 = vadd.f32 %v2846, %v2858
    %v2860 = vpop.f32.mrf.mxu0
    %2861 = vdwg.mxu0
    %2862 = vmatpush.bf16.msra.mxu0 %v1815
    %2863 = vmatpush.bf16.msra.mxu0 %v1813
    %2864 = vmatpush.bf16.msra.mxu0 %v1811
    %2865 = vmatpush.bf16.msra.mxu0 %v1809
    %2866 = vmatpush.bf16.msra.mxu0 %v1807
    %2867 = vmatpush.bf16.msra.mxu0 %v1805
    %2868 = vmatpush.bf16.msra.mxu0 %v1803
    %2869 = vmatpush.bf16.msra.mxu0 %v1801
    %2870 = vmatmul.bf16.gmra.mxu0 %v144
    %v2871 = vpop.f32.mrf.mxu0
    %v2872 = vadd.f32 %v2859, %v2871
    %v2873 = vpop.f32.mrf.mxu0
    %2874 = vdwg.mxu0
    %2875 = vmatpush.bf16.msra.mxu0 %v1831
    %2876 = vmatpush.bf16.msra.mxu0 %v1829
    %2877 = vmatpush.bf16.msra.mxu0 %v1827
    %2878 = vmatpush.bf16.msra.mxu0 %v1825
    %2879 = vmatpush.bf16.msra.mxu0 %v1823
    %2880 = vmatpush.bf16.msra.mxu0 %v1821
    %2881 = vmatpush.bf16.msra.mxu0 %v1819
    %2882 = vmatpush.bf16.msra.mxu0 %v1817
    %2883 = vmatmul.bf16.gmra.mxu0 %v145
    %v2884 = vpop.f32.mrf.mxu0
    %v2885 = vadd.f32 %v2872, %v2884
    %v2886 = vpop.f32.mrf.mxu0
    %2887 = vdwg.mxu0
    %2888 = vmatpush.bf16.msra.mxu0 %v1847
    %2889 = vmatpush.bf16.msra.mxu0 %v1845
    %2890 = vmatpush.bf16.msra.mxu0 %v1843
    %2891 = vmatpush.bf16.msra.mxu0 %v1841
    %2892 = vmatpush.bf16.msra.mxu0 %v1839
    %2893 = vmatpush.bf16.msra.mxu0 %v1837
    %2894 = vmatpush.bf16.msra.mxu0 %v1835
    %2895 = vmatpush.bf16.msra.mxu0 %v1833
    %2896 = vmatmul.bf16.gmra.mxu0 %v146
    %v2897 = vpop.f32.mrf.mxu0
    %v2898 = vadd.f32 %v2885, %v2897
    %v2899 = vpop.f32.mrf.mxu0
    %2900 = vdwg.mxu0
    %2901 = vmatpush.bf16.msra.mxu0 %v1863
    %2902 = vmatpush.bf16.msra.mxu0 %v1861
    %2903 = vmatpush.bf16.msra.mxu0 %v1859
    %2904 = vmatpush.bf16.msra.mxu0 %v1857
    %2905 = vmatpush.bf16.msra.mxu0 %v1855
    %2906 = vmatpush.bf16.msra.mxu0 %v1853
    %2907 = vmatpush.bf16.msra.mxu0 %v1851
    %2908 = vmatpush.bf16.msra.mxu0 %v1849
    %2909 = vmatmul.bf16.gmra.mxu0 %v147
    %v2910 = vpop.f32.mrf.mxu0
    %v2911 = vadd.f32 %v2898, %v2910
    %v2912 = vpop.f32.mrf.mxu0
    %2913 = vdwg.mxu0
    %2914 = vmatpush.bf16.msra.mxu0 %v1879
    %2915 = vmatpush.bf16.msra.mxu0 %v1877
    %2916 = vmatpush.bf16.msra.mxu0 %v1875
    %2917 = vmatpush.bf16.msra.mxu0 %v1873
    %2918 = vmatpush.bf16.msra.mxu0 %v1871
    %2919 = vmatpush.bf16.msra.mxu0 %v1869
    %2920 = vmatpush.bf16.msra.mxu0 %v1867
    %2921 = vmatpush.bf16.msra.mxu0 %v1865
    %2922 = vmatmul.bf16.gmra.mxu0 %v148
    %v2923 = vpop.f32.mrf.mxu0
    %v2924 = vadd.f32 %v2911, %v2923
    %v2925 = vpop.f32.mrf.mxu0
    %2926 = vdwg.mxu0
    %2927 = vmatpush.bf16.msra.mxu0 %v1895
    %2928 = vmatpush.bf16.msra.mxu0 %v1893
    %2929 = vmatpush.bf16.msra.mxu0 %v1891
    %2930 = vmatpush.bf16.msra.mxu0 %v1889
    %2931 = vmatpush.bf16.msra.mxu0 %v1887
    %2932 = vmatpush.bf16.msra.mxu0 %v1885
    %2933 = vmatpush.bf16.msra.mxu0 %v1883
    %2934 = vmatpush.bf16.msra.mxu0 %v1881
    %2935 = vmatmul.bf16.gmra.mxu0 %v149
    %v2936 = vpop.f32.mrf.mxu0
    %v2937 = vadd.f32 %v2924, %v2936
    %v2938 = vpop.f32.mrf.mxu0
    %2939 = vdwg.mxu0
    %2940 = vmatpush.bf16.msra.mxu0 %v1911
    %2941 = vmatpush.bf16.msra.mxu0 %v1909
    %2942 = vmatpush.bf16.msra.mxu0 %v1907
    %2943 = vmatpush.bf16.msra.mxu0 %v1905
    %2944 = vmatpush.bf16.msra.mxu0 %v1903
    %2945 = vmatpush.bf16.msra.mxu0 %v1901
    %2946 = vmatpush.bf16.msra.mxu0 %v1899
    %2947 = vmatpush.bf16.msra.mxu0 %v1897
    %2948 = vmatmul.bf16.gmra.mxu0 %v150
    %v2949 = vpop.f32.mrf.mxu0
    %v2950 = vadd.f32 %v2937, %v2949
    %v2951 = vpop.f32.mrf.mxu0
    %2952 = vdwg.mxu0
    %2953 = vmatpush.bf16.msra.mxu0 %v1927
    %2954 = vmatpush.bf16.msra.mxu0 %v1925
    %2955 = vmatpush.bf16.msra.mxu0 %v1923
    %2956 = vmatpush.bf16.msra.mxu0 %v1921
    %2957 = vmatpush.bf16.msra.mxu0 %v1919
    %2958 = vmatpush.bf16.msra.mxu0 %v1917
    %2959 = vmatpush.bf16.msra.mxu0 %v1915
    %2960 = vmatpush.bf16.msra.mxu0 %v1913
    %2961 = vmatmul.bf16.gmra.mxu0 %v151
    %v2962 = vpop.f32.mrf.mxu0
    %v2963 = vadd.f32 %v2950, %v2962
    %v2964 = vpop.f32.mrf.mxu0
    %2965 = vdwg.mxu0
    %2966 = vmatpush.bf16.msra.mxu0 %v1943
    %2967 = vmatpush.bf16.msra.mxu0 %v1941
    %2968 = vmatpush.bf16.msra.mxu0 %v1939
    %2969 = vmatpush.bf16.msra.mxu0 %v1937
    %2970 = vmatpush.bf16.msra.mxu0 %v1935
    %2971 = vmatpush.bf16.msra.mxu0 %v1933
    %2972 = vmatpush.bf16.msra.mxu0 %v1931
    %2973 = vmatpush.bf16.msra.mxu0 %v1929
    %2974 = vmatmul.bf16.gmra.mxu0 %v152
    %v2975 = vpop.f32.mrf.mxu0
    %v2976 = vadd.f32 %v2963, %v2975
    %v2977 = vpop.f32.mrf.mxu0
    %2978 = vdwg.mxu0
    %2979 = vmatpush.bf16.msra.mxu0 %v1959
    %2980 = vmatpush.bf16.msra.mxu0 %v1957
    %2981 = vmatpush.bf16.msra.mxu0 %v1955
    %2982 = vmatpush.bf16.msra.mxu0 %v1953
    %2983 = vmatpush.bf16.msra.mxu0 %v1951
    %2984 = vmatpush.bf16.msra.mxu0 %v1949
    %2985 = vmatpush.bf16.msra.mxu0 %v1947
    %2986 = vmatpush.bf16.msra.mxu0 %v1945
    %2987 = vmatmul.bf16.gmra.mxu0 %v153
    %v2988 = vpop.f32.mrf.mxu0
    %v2989 = vadd.f32 %v2976, %v2988
    %v2990 = vpop.f32.mrf.mxu0
    %2991 = vdwg.mxu0
    %2992 = vmatpush.bf16.msra.mxu0 %v1975
    %2993 = vmatpush.bf16.msra.mxu0 %v1973
    %2994 = vmatpush.bf16.msra.mxu0 %v1971
    %2995 = vmatpush.bf16.msra.mxu0 %v1969
    %2996 = vmatpush.bf16.msra.mxu0 %v1967
    %2997 = vmatpush.bf16.msra.mxu0 %v1965
    %2998 = vmatpush.bf16.msra.mxu0 %v1963
    %2999 = vmatpush.bf16.msra.mxu0 %v1961
    %3000 = vmatmul.bf16.gmra.mxu0 %v154
    %v3001 = vpop.f32.mrf.mxu0
    %v3002 = vadd.f32 %v2989, %v3001
    %v3003 = vpop.f32.mrf.mxu0
    %3004 = vdwg.mxu0
    %3005 = vmatpush.bf16.msra.mxu0 %v1991
    %3006 = vmatpush.bf16.msra.mxu0 %v1989
    %3007 = vmatpush.bf16.msra.mxu0 %v1987
    %3008 = vmatpush.bf16.msra.mxu0 %v1985
    %3009 = vmatpush.bf16.msra.mxu0 %v1983
    %3010 = vmatpush.bf16.msra.mxu0 %v1981
    %3011 = vmatpush.bf16.msra.mxu0 %v1979
    %3012 = vmatpush.bf16.msra.mxu0 %v1977
    %3013 = vmatmul.bf16.gmra.mxu0 %v155
    %v3014 = vpop.f32.mrf.mxu0
    %v3015 = vadd.f32 %v3002, %v3014
    %v3016 = vpop.f32.mrf.mxu0
    %3017 = vdwg.mxu0
    %3018 = vmatpush.bf16.msra.mxu0 %v2007
    %3019 = vmatpush.bf16.msra.mxu0 %v2005
    %3020 = vmatpush.bf16.msra.mxu0 %v2003
    %3021 = vmatpush.bf16.msra.mxu0 %v2001
    %3022 = vmatpush.bf16.msra.mxu0 %v1999
    %3023 = vmatpush.bf16.msra.mxu0 %v1997
    %3024 = vmatpush.bf16.msra.mxu0 %v1995
    %3025 = vmatpush.bf16.msra.mxu0 %v1993
    %3026 = vmatmul.bf16.gmra.mxu0 %v156
    %v3027 = vpop.f32.mrf.mxu0
    %v3028 = vadd.f32 %v3015, %v3027
    %v3029 = vpop.f32.mrf.mxu0
    %3030 = vdwg.mxu0
    %3031 = vmatpush.bf16.msra.mxu0 %v2023
    %3032 = vmatpush.bf16.msra.mxu0 %v2021
    %3033 = vmatpush.bf16.msra.mxu0 %v2019
    %3034 = vmatpush.bf16.msra.mxu0 %v2017
    %3035 = vmatpush.bf16.msra.mxu0 %v2015
    %3036 = vmatpush.bf16.msra.mxu0 %v2013
    %3037 = vmatpush.bf16.msra.mxu0 %v2011
    %3038 = vmatpush.bf16.msra.mxu0 %v2009
    %3039 = vmatmul.bf16.gmra.mxu0 %v157
    %v3040 = vpop.f32.mrf.mxu0
    %v3041 = vadd.f32 %v3028, %v3040
    %v3042 = vpop.f32.mrf.mxu0
    %3043 = vdwg.mxu0
    %3044 = vmatpush.bf16.msra.mxu0 %v2039
    %3045 = vmatpush.bf16.msra.mxu0 %v2037
    %3046 = vmatpush.bf16.msra.mxu0 %v2035
    %3047 = vmatpush.bf16.msra.mxu0 %v2033
    %3048 = vmatpush.bf16.msra.mxu0 %v2031
    %3049 = vmatpush.bf16.msra.mxu0 %v2029
    %3050 = vmatpush.bf16.msra.mxu0 %v2027
    %3051 = vmatpush.bf16.msra.mxu0 %v2025
    %3052 = vmatmul.bf16.gmra.mxu0 %v158
    %v3053 = vpop.f32.mrf.mxu0
    %v3054 = vadd.f32 %v3041, %v3053
    %v3055 = vpop.f32.mrf.mxu0
    %3056 = vdwg.mxu0
    %3057 = vmatpush.bf16.msra.mxu0 %v2055
    %3058 = vmatpush.bf16.msra.mxu0 %v2053
    %3059 = vmatpush.bf16.msra.mxu0 %v2051
    %3060 = vmatpush.bf16.msra.mxu0 %v2049
    %3061 = vmatpush.bf16.msra.mxu0 %v2047
    %3062 = vmatpush.bf16.msra.mxu0 %v2045
    %3063 = vmatpush.bf16.msra.mxu0 %v2043
    %3064 = vmatpush.bf16.msra.mxu0 %v2041
    %3065 = vmatmul.bf16.gmra.mxu0 %v159
    %v3066 = vpop.f32.mrf.mxu0
    %v3067 = vadd.f32 %v3054, %v3066
    %v3068 = vpop.f32.mrf.mxu0
    %3069 = vdwg.mxu0
    %3070 = vmatpush.bf16.msra.mxu0 %v2071
    %3071 = vmatpush.bf16.msra.mxu0 %v2069
    %3072 = vmatpush.bf16.msra.mxu0 %v2067
    %3073 = vmatpush.bf16.msra.mxu0 %v2065
    %3074 = vmatpush.bf16.msra.mxu0 %v2063
    %3075 = vmatpush.bf16.msra.mxu0 %v2061
    %3076 = vmatpush.bf16.msra.mxu0 %v2059
    %3077 = vmatpush.bf16.msra.mxu0 %v2057
    %3078 = vmatmul.bf16.gmra.mxu0 %v160
    %v3079 = vpop.f32.mrf.mxu0
    %v3080 = vadd.f32 %v3067, %v3079
    %v3081 = vpop.f32.mrf.mxu0
    %3082 = vdwg.mxu0
    %3083 = vmatpush.bf16.msra.mxu0 %v2087
    %3084 = vmatpush.bf16.msra.mxu0 %v2085
    %3085 = vmatpush.bf16.msra.mxu0 %v2083
    %3086 = vmatpush.bf16.msra.mxu0 %v2081
    %3087 = vmatpush.bf16.msra.mxu0 %v2079
    %3088 = vmatpush.bf16.msra.mxu0 %v2077
    %3089 = vmatpush.bf16.msra.mxu0 %v2075
    %3090 = vmatpush.bf16.msra.mxu0 %v2073
    %3091 = vmatmul.bf16.gmra.mxu0 %v161
    %v3092 = vpop.f32.mrf.mxu0
    %v3093 = vadd.f32 %v3080, %v3092
    %v3094 = vpop.f32.mrf.mxu0
    %3095 = vdwg.mxu0
    %v3096 = vmax.f32 %v2781, 0.0
    %v3097 = vmax.f32 %v3093, 0.0
    %v3098 = vpack.c.bf16 %v3096, %v3096
    %v3099 = vpack.c.bf16 %v3097, %v3097
    %v3100 = vld [vmem:[#allocation6] sm:$0xff]
    %v3101 = vld [vmem:[#allocation6 + $0x8] sm:$0xff]
    %v3102 = vld [vmem:[#allocation6 + $0x10] sm:$0xff]
    %v3103 = vld [vmem:[#allocation6 + $0x18] sm:$0xff]
    %v3104 = vld [vmem:[#allocation6 + $0x20] sm:$0xff]
    %v3105 = vld [vmem:[#allocation6 + $0x28] sm:$0xff]
    %v3106 = vld [vmem:[#allocation6 + $0x30] sm:$0xff]
    %v3107 = vld [vmem:[#allocation6 + $0x38] sm:$0xff]
    %v3108 = vld [vmem:[#allocation6 + $0x40] sm:$0xff]
    %v3109 = vld [vmem:[#allocation6 + $0x48] sm:$0xff]
    %v3110 = vld [vmem:[#allocation6 + $0x50] sm:$0xff]
    %v3111 = vld [vmem:[#allocation6 + $0x58] sm:$0xff]
    %v3112 = vld [vmem:[#allocation6 + $0x60] sm:$0xff]
    %v3113 = vld [vmem:[#allocation6 + $0x68] sm:$0xff]
    %v3114 = vld [vmem:[#allocation6 + $0x70] sm:$0xff]
    %v3115 = vld [vmem:[#allocation6 + $0x78] sm:$0xff]
    %v3116 = vld [vmem:[#allocation6 + $0x80] sm:$0xff]
    %v3117 = vld [vmem:[#allocation6 + $0x88] sm:$0xff]
    %v3118 = vld [vmem:[#allocation6 + $0x90] sm:$0xff]
    %v3119 = vld [vmem:[#allocation6 + $0x98] sm:$0xff]
    %v3120 = vld [vmem:[#allocation6 + $0xa0] sm:$0xff]
    %v3121 = vld [vmem:[#allocation6 + $0xa8] sm:$0xff]
    %v3122 = vld [vmem:[#allocation6 + $0xb0] sm:$0xff]
    %v3123 = vld [vmem:[#allocation6 + $0xb8] sm:$0xff]
    %v3124 = vld [vmem:[#allocation6 + $0xc0] sm:$0xff]
    %v3125 = vld [vmem:[#allocation6 + $0xc8] sm:$0xff]
    %v3126 = vld [vmem:[#allocation6 + $0xd0] sm:$0xff]
    %v3127 = vld [vmem:[#allocation6 + $0xd8] sm:$0xff]
    %v3128 = vld [vmem:[#allocation6 + $0xe0] sm:$0xff]
    %v3129 = vld [vmem:[#allocation6 + $0xe8] sm:$0xff]
    %v3130 = vld [vmem:[#allocation6 + $0xf0] sm:$0xff]
    %v3131 = vld [vmem:[#allocation6 + $0xf8] sm:$0xff]
    %v3132 = vld [vmem:[#allocation7] sm:$0x3]
    %v3134 = vperm.slane %v3132, 0
    %v3135 = vperm.slane %v3132, 1
    %v3170 = vunpack.c.l.b16 %v3100
    %v3171 = vunpack.c.h.b16 %v3100
    %v3172 = vunpack.c.l.b16 %v3101
    %v3173 = vunpack.c.h.b16 %v3101
    %v3174 = vunpack.c.l.b16 %v3102
    %v3175 = vunpack.c.h.b16 %v3102
    %v3176 = vunpack.c.l.b16 %v3103
    %v3177 = vunpack.c.h.b16 %v3103
    %v3178 = vunpack.c.l.b16 %v3104
    %v3179 = vunpack.c.h.b16 %v3104
    %v3180 = vunpack.c.l.b16 %v3105
    %v3181 = vunpack.c.h.b16 %v3105
    %v3182 = vunpack.c.l.b16 %v3106
    %v3183 = vunpack.c.h.b16 %v3106
    %v3184 = vunpack.c.l.b16 %v3107
    %v3185 = vunpack.c.h.b16 %v3107
    %v3186 = vunpack.c.l.b16 %v3108
    %v3187 = vunpack.c.h.b16 %v3108
    %v3188 = vunpack.c.l.b16 %v3109
    %v3189 = vunpack.c.h.b16 %v3109
    %v3190 = vunpack.c.l.b16 %v3110
    %v3191 = vunpack.c.h.b16 %v3110
    %v3192 = vunpack.c.l.b16 %v3111
    %v3193 = vunpack.c.h.b16 %v3111
    %v3194 = vunpack.c.l.b16 %v3112
    %v3195 = vunpack.c.h.b16 %v3112
    %v3196 = vunpack.c.l.b16 %v3113
    %v3197 = vunpack.c.h.b16 %v3113
    %v3198 = vunpack.c.l.b16 %v3114
    %v3199 = vunpack.c.h.b16 %v3114
    %v3200 = vunpack.c.l.b16 %v3115
    %v3201 = vunpack.c.h.b16 %v3115
    %v3202 = vunpack.c.l.b16 %v3116
    %v3203 = vunpack.c.h.b16 %v3116
    %v3204 = vunpack.c.l.b16 %v3117
    %v3205 = vunpack.c.h.b16 %v3117
    %v3206 = vunpack.c.l.b16 %v3118
    %v3207 = vunpack.c.h.b16 %v3118
    %v3208 = vunpack.c.l.b16 %v3119
    %v3209 = vunpack.c.h.b16 %v3119
    %v3210 = vunpack.c.l.b16 %v3120
    %v3211 = vunpack.c.h.b16 %v3120
    %v3212 = vunpack.c.l.b16 %v3121
    %v3213 = vunpack.c.h.b16 %v3121
    %v3214 = vunpack.c.l.b16 %v3122
    %v3215 = vunpack.c.h.b16 %v3122
    %v3216 = vunpack.c.l.b16 %v3123
    %v3217 = vunpack.c.h.b16 %v3123
    %v3218 = vunpack.c.l.b16 %v3124
    %v3219 = vunpack.c.h.b16 %v3124
    %v3220 = vunpack.c.l.b16 %v3125
    %v3221 = vunpack.c.h.b16 %v3125
    %v3222 = vunpack.c.l.b16 %v3126
    %v3223 = vunpack.c.h.b16 %v3126
    %v3224 = vunpack.c.l.b16 %v3127
    %v3225 = vunpack.c.h.b16 %v3127
    %v3226 = vunpack.c.l.b16 %v3128
    %v3227 = vunpack.c.h.b16 %v3128
    %v3228 = vunpack.c.l.b16 %v3129
    %v3229 = vunpack.c.h.b16 %v3129
    %v3230 = vunpack.c.l.b16 %v3130
    %v3231 = vunpack.c.h.b16 %v3130
    %v3232 = vunpack.c.l.b16 %v3131
    %v3233 = vunpack.c.h.b16 %v3131
    %v3234 = vpack.c.b16 %v3172, %v3170
    %v3235 = vpack.c.b16 %v3173, %v3171
    %v3236 = vpack.c.b16 %v3176, %v3174
    %v3237 = vpack.c.b16 %v3177, %v3175
    %v3238 = vpack.c.b16 %v3180, %v3178
    %v3239 = vpack.c.b16 %v3181, %v3179
    %v3240 = vpack.c.b16 %v3184, %v3182
    %v3241 = vpack.c.b16 %v3185, %v3183
    %v3242 = vpack.c.b16 %v3188, %v3186
    %v3243 = vpack.c.b16 %v3189, %v3187
    %v3244 = vpack.c.b16 %v3192, %v3190
    %v3245 = vpack.c.b16 %v3193, %v3191
    %v3246 = vpack.c.b16 %v3196, %v3194
    %v3247 = vpack.c.b16 %v3197, %v3195
    %v3248 = vpack.c.b16 %v3200, %v3198
    %v3249 = vpack.c.b16 %v3201, %v3199
    %v3250 = vpack.c.b16 %v3204, %v3202
    %v3251 = vpack.c.b16 %v3205, %v3203
    %v3252 = vpack.c.b16 %v3208, %v3206
    %v3253 = vpack.c.b16 %v3209, %v3207
    %v3254 = vpack.c.b16 %v3212, %v3210
    %v3255 = vpack.c.b16 %v3213, %v3211
    %v3256 = vpack.c.b16 %v3216, %v3214
    %v3257 = vpack.c.b16 %v3217, %v3215
    %v3258 = vpack.c.b16 %v3220, %v3218
    %v3259 = vpack.c.b16 %v3221, %v3219
    %v3260 = vpack.c.b16 %v3224, %v3222
    %v3261 = vpack.c.b16 %v3225, %v3223
    %v3262 = vpack.c.b16 %v3228, %v3226
    %v3263 = vpack.c.b16 %v3229, %v3227
    %v3264 = vpack.c.b16 %v3232, %v3230
    %v3265 = vpack.c.b16 %v3233, %v3231
    %3298 = vmatpush.bf16.msra.mxu0 %v3248
    %3299 = vmatpush.bf16.msra.mxu0 %v3246
    %3300 = vmatpush.bf16.msra.mxu0 %v3244
    %3301 = vmatpush.bf16.msra.mxu0 %v3242
    %3302 = vmatpush.bf16.msra.mxu0 %v3240
    %3303 = vmatpush.bf16.msra.mxu0 %v3238
    %3304 = vmatpush.bf16.msra.mxu0 %v3236
    %3305 = vmatpush.bf16.msra.mxu0 %v3234
    %3306 = vmatmul.bf16.gmra.mxu0 %v3098
    %v3307 = vpop.f32.mrf.mxu0
    %v3308 = vadd.f32 %v3134, %v3307
    %v3309 = vpop.f32.mrf.mxu0
    %3310 = vdwg.mxu0
    %3311 = vmatpush.bf16.msra.mxu0 %v3264
    %3312 = vmatpush.bf16.msra.mxu0 %v3262
    %3313 = vmatpush.bf16.msra.mxu0 %v3260
    %3314 = vmatpush.bf16.msra.mxu0 %v3258
    %3315 = vmatpush.bf16.msra.mxu0 %v3256
    %3316 = vmatpush.bf16.msra.mxu0 %v3254
    %3317 = vmatpush.bf16.msra.mxu0 %v3252
    %3318 = vmatpush.bf16.msra.mxu0 %v3250
    %3319 = vmatmul.bf16.gmra.mxu0 %v3099
    %v3320 = vpop.f32.mrf.mxu0
    %v3321 = vadd.f32 %v3308, %v3320
    %v3322 = vpop.f32.mrf.mxu0
    %3323 = vdwg.mxu0
    %3324 = vmatpush.bf16.msra.mxu0 %v3249
    %3325 = vmatpush.bf16.msra.mxu0 %v3247
    %3326 = vmatpush.bf16.msra.mxu0 %v3245
    %3327 = vmatpush.bf16.msra.mxu0 %v3243
    %3328 = vmatpush.bf16.msra.mxu0 %v3241
    %3329 = vmatpush.bf16.msra.mxu0 %v3239
    %3330 = vmatpush.bf16.msra.mxu0 %v3237
    %3331 = vmatpush.bf16.msra.mxu0 %v3235
    %3332 = vmatmul.bf16.gmra.mxu0 %v3098
    %v3333 = vpop.f32.mrf.mxu0
    %v3334 = vadd.f32 %v3135, %v3333
    %v3335 = vpop.f32.mrf.mxu0
    %3336 = vdwg.mxu0
    %3337 = vmatpush.bf16.msra.mxu0 %v3265
    %3338 = vmatpush.bf16.msra.mxu0 %v3263
    %3339 = vmatpush.bf16.msra.mxu0 %v3261
    %3340 = vmatpush.bf16.msra.mxu0 %v3259
    %3341 = vmatpush.bf16.msra.mxu0 %v3257
    %3342 = vmatpush.bf16.msra.mxu0 %v3255
    %3343 = vmatpush.bf16.msra.mxu0 %v3253
    %3344 = vmatpush.bf16.msra.mxu0 %v3251
    %3345 = vmatmul.bf16.gmra.mxu0 %v3099
    %v3346 = vpop.f32.mrf.mxu0
    %v3347 = vadd.f32 %v3334, %v3346
    %v3348 = vpop.f32.mrf.mxu0
    %3349 = vdwg.mxu0
    %v3350 = vmax.f32 %v3321, 0.0
    %v3351 = vmax.f32 %v3347, 0.0
    %v3352 = vpack.c.bf16 %v3350, %v3350
    %v3353 = vpack.c.bf16 %v3351, %v3351
    %v3354 = vld [vmem:[#allocation9] sm:$0xf]
    %v3355 = vld [vmem:[#allocation9 + $0x4] sm:$0xf]
    %v3356 = vld [vmem:[#allocation9 + $0x8] sm:$0xf]
    %v3357 = vld [vmem:[#allocation9 + $0xc] sm:$0xf]
    %v3358 = vld [vmem:[#allocation9 + $0x10] sm:$0xf]
    %v3359 = vld [vmem:[#allocation9 + $0x14] sm:$0xf]
    %v3360 = vld [vmem:[#allocation9 + $0x18] sm:$0xf]
    %v3361 = vld [vmem:[#allocation9 + $0x1c] sm:$0xf]
    %v3362 = vld [vmem:[#allocation9 + $0x20] sm:$0xf]
    %v3363 = vld [vmem:[#allocation9 + $0x24] sm:$0xf]
    %v3364 = vld [vmem:[#allocation9 + $0x28] sm:$0xf]
    %v3365 = vld [vmem:[#allocation9 + $0x2c] sm:$0xf]
    %v3366 = vld [vmem:[#allocation9 + $0x30] sm:$0xf]
    %v3367 = vld [vmem:[#allocation9 + $0x34] sm:$0xf]
    %v3368 = vld [vmem:[#allocation9 + $0x38] sm:$0xf]
    %v3369 = vld [vmem:[#allocation9 + $0x3c] sm:$0xf]
    %v3370 = vld [vmem:[#allocation9 + $0x40] sm:$0xf]
    %v3371 = vld [vmem:[#allocation9 + $0x44] sm:$0xf]
    %v3372 = vld [vmem:[#allocation9 + $0x48] sm:$0xf]
    %v3373 = vld [vmem:[#allocation9 + $0x4c] sm:$0xf]
    %v3374 = vld [vmem:[#allocation9 + $0x50] sm:$0xf]
    %v3375 = vld [vmem:[#allocation9 + $0x54] sm:$0xf]
    %v3376 = vld [vmem:[#allocation9 + $0x58] sm:$0xf]
    %v3377 = vld [vmem:[#allocation9 + $0x5c] sm:$0xf]
    %v3378 = vld [vmem:[#allocation9 + $0x60] sm:$0xf]
    %v3379 = vld [vmem:[#allocation9 + $0x64] sm:$0xf]
    %v3380 = vld [vmem:[#allocation9 + $0x68] sm:$0xf]
    %v3381 = vld [vmem:[#allocation9 + $0x6c] sm:$0xf]
    %v3382 = vld [vmem:[#allocation9 + $0x70] sm:$0xf]
    %v3383 = vld [vmem:[#allocation9 + $0x74] sm:$0xf]
    %v3384 = vld [vmem:[#allocation9 + $0x78] sm:$0xf]
    %v3385 = vld [vmem:[#allocation9 + $0x7c] sm:$0xf]
    %v3386 = vld [vmem:[#allocation10] sm:$0x1]
    %v3388 = vperm.slane %v3386, 0
    %v3422 = vunpack.c.l.b16 %v3354
    %v3423 = vunpack.c.l.b16 %v3355
    %v3424 = vunpack.c.l.b16 %v3356
    %v3425 = vunpack.c.l.b16 %v3357
    %v3426 = vunpack.c.l.b16 %v3358
    %v3427 = vunpack.c.l.b16 %v3359
    %v3428 = vunpack.c.l.b16 %v3360
    %v3429 = vunpack.c.l.b16 %v3361
    %v3430 = vunpack.c.l.b16 %v3362
    %v3431 = vunpack.c.l.b16 %v3363
    %v3432 = vunpack.c.l.b16 %v3364
    %v3433 = vunpack.c.l.b16 %v3365
    %v3434 = vunpack.c.l.b16 %v3366
    %v3435 = vunpack.c.l.b16 %v3367
    %v3436 = vunpack.c.l.b16 %v3368
    %v3437 = vunpack.c.l.b16 %v3369
    %v3438 = vunpack.c.l.b16 %v3370
    %v3439 = vunpack.c.l.b16 %v3371
    %v3440 = vunpack.c.l.b16 %v3372
    %v3441 = vunpack.c.l.b16 %v3373
    %v3442 = vunpack.c.l.b16 %v3374
    %v3443 = vunpack.c.l.b16 %v3375
    %v3444 = vunpack.c.l.b16 %v3376
    %v3445 = vunpack.c.l.b16 %v3377
    %v3446 = vunpack.c.l.b16 %v3378
    %v3447 = vunpack.c.l.b16 %v3379
    %v3448 = vunpack.c.l.b16 %v3380
    %v3449 = vunpack.c.l.b16 %v3381
    %v3450 = vunpack.c.l.b16 %v3382
    %v3451 = vunpack.c.l.b16 %v3383
    %v3452 = vunpack.c.l.b16 %v3384
    %v3453 = vunpack.c.l.b16 %v3385
    %v3454 = vpack.c.b16 %v3423, %v3422
    %v3455 = vpack.c.b16 %v3425, %v3424
    %v3456 = vpack.c.b16 %v3427, %v3426
    %v3457 = vpack.c.b16 %v3429, %v3428
    %v3458 = vpack.c.b16 %v3431, %v3430
    %v3459 = vpack.c.b16 %v3433, %v3432
    %v3460 = vpack.c.b16 %v3435, %v3434
    %v3461 = vpack.c.b16 %v3437, %v3436
    %v3462 = vpack.c.b16 %v3439, %v3438
    %v3463 = vpack.c.b16 %v3441, %v3440
    %v3464 = vpack.c.b16 %v3443, %v3442
    %v3465 = vpack.c.b16 %v3445, %v3444
    %v3466 = vpack.c.b16 %v3447, %v3446
    %v3467 = vpack.c.b16 %v3449, %v3448
    %v3468 = vpack.c.b16 %v3451, %v3450
    %v3469 = vpack.c.b16 %v3453, %v3452
    %3486 = vmatpush.bf16.msra.mxu0 %v3461
    %3487 = vmatpush.bf16.msra.mxu0 %v3460
    %3488 = vmatpush.bf16.msra.mxu0 %v3459
    %3489 = vmatpush.bf16.msra.mxu0 %v3458
    %3490 = vmatpush.bf16.msra.mxu0 %v3457
    %3491 = vmatpush.bf16.msra.mxu0 %v3456
    %3492 = vmatpush.bf16.msra.mxu0 %v3455
    %3493 = vmatpush.bf16.msra.mxu0 %v3454
    %3494 = vmatmul.bf16.gmra.mxu0 %v3352
    %v3495 = vpop.f32.mrf.mxu0
    %v3496 = vadd.f32 %v3388, %v3495
    %v3497 = vpop.f32.mrf.mxu0
    %3498 = vdwg.mxu0
    %3499 = vmatpush.bf16.msra.mxu0 %v3469
    %3500 = vmatpush.bf16.msra.mxu0 %v3468
    %3501 = vmatpush.bf16.msra.mxu0 %v3467
    %3502 = vmatpush.bf16.msra.mxu0 %v3466
    %3503 = vmatpush.bf16.msra.mxu0 %v3465
    %3504 = vmatpush.bf16.msra.mxu0 %v3464
    %3505 = vmatpush.bf16.msra.mxu0 %v3463
    %3506 = vmatpush.bf16.msra.mxu0 %v3462
    %3507 = vmatmul.bf16.gmra.mxu0 %v3353
    %v3508 = vpop.f32.mrf.mxu0
    %v3509 = vadd.f32 %v3496, %v3508
    %v3510 = vpop.f32.mrf.mxu0
    %3511 = vdwg.mxu0
    %3512 = vst [vmem:[%s7] sm:$0xff] %v3509
    // Predicated region
    $region54: #{cifar_2nn_forward.1} parent=1 // pred_check
      _
    $region55: #{cifar_2nn_forward.1} parent=1 // pred_check_branch
      %3514 = sbr.rel (0) target = $region57
    $region56: #{cifar_2nn_forward.1} parent=1 // pred_region
      _
    $region57: #{cifar_2nn_forward.1} parent=1 // pred_fallthru
      _
    // Predicated region
    $region58: #{cifar_2nn_forward.1} parent=1 // pred_check
      _
    $region59: #{cifar_2nn_forward.1} parent=1 // pred_check_branch
      %3516 = sbr.rel (0) target = $region61
    $region60: #{cifar_2nn_forward.1} parent=1 // pred_region
      _
    $region61: #{cifar_2nn_forward.1} parent=1 // pred_fallthru
      _
    %3517 = vsyncpa [#allocation3], 1
    %3518 = vsyncpa [#allocation5], 1
    %3519 = vsyncpa [#allocation8], 1
    %3520 = vsyncpa [#allocation11], 1

</llo_original>
